<compile_context>
chip_gen: v7x
topology: tpu7x:2x2x1
jax: 0.10.0
libtpu: 0.0.40
codegen_flags: <defaults>
</compile_context>

<pallas_src>
import jax
import jax.numpy as jnp
from jax.experimental import pallas as pl
from jax.experimental.pallas import tpu as pltpu


# ----------------------------- kernel ---------------------------------------
def _make_mblock_kernel(C, H, W):
    """Builds the fused _M_block kernel for a given channel count / image size."""
    HW = H * W
    Ch = C // 2
    K1 = 9 * C            # im2col rows contributed by x
    K2 = K1 + 9 * Ch      # ... plus out1
    K3 = K2 + 9 * Ch      # ... plus out2  (= 9 * 2C)

    def kernel(x_ref, mask_ref, w1_ref, b1_ref, w2_ref, b2_ref,
               w3_ref, b3_ref, alpha_ref, out_ref, s_ref):
        # x_ref   : (1, C, HW)      input image, flattened spatial on lanes
        # mask_ref: (9, HW)         0/1 halo masks per 3x3 tap
        # wN_ref  : (CoutN, K_N)    packed conv weights (group-major, tap-major, ci)
        # bN_ref  : (CoutN, 1)      biases
        # alpha_ref: (3,)  SMEM     shared PReLU alphas
        # out_ref : (1, C, HW)
        # s_ref   : (K3, HW) VMEM   shared im2col scratch

        def emit_taps(v, base):
            """Write the 9 shifted/masked copies of v (Cg, HW) into s_ref rows."""
            cg = v.shape[0]
            for kh in range(3):
                for kw in range(3):
                    t = kh * 3 + kw
                    delta = (kh - 1) * W + (kw - 1)      # flat-index shift of this tap
                    r0 = base + t * cg
                    if delta == 0:
                        s_ref[r0:r0 + cg, :] = v
                    elif delta > 0:
                        nv = HW - delta
                        s_ref[r0:r0 + cg, 0:nv] = (
                            v[:, delta:] * mask_ref[t:t + 1, 0:nv])
                    else:
                        d = -delta
                        nv = HW - d
                        s_ref[r0:r0 + cg, d:HW] = (
                            v[:, 0:nv] * mask_ref[t:t + 1, d:HW])

        # Zero the scratch so the never-written halo lanes contribute exactly 0.
        s_ref[...] = jnp.zeros(s_ref.shape, s_ref.dtype)

        x = x_ref[0]                                              # (C, HW)

        # ---- conv_1 + PReLU --------------------------------------------------
        emit_taps(x, 0)
        z1 = jnp.dot(w1_ref[...], s_ref[0:K1, :],
                     preferred_element_type=jnp.float32) + b1_ref[...]
        o1 = jnp.where(z1 > 0, z1, alpha_ref[0] * z1)             # (C/2, HW)

        # ---- conv_2 + PReLU  (input = [x, o1], via K-reuse, no concat) -------
        emit_taps(o1, K1)
        z2 = jnp.dot(w2_ref[...], s_ref[0:K2, :],
                     preferred_element_type=jnp.float32) + b2_ref[...]
        o2 = jnp.where(z2 > 0, z2, alpha_ref[1] * z2)             # (C/2, HW)

        # ---- conv_3 + PReLU  (input = [x, o1, o2]) ---------------------------
        emit_taps(o2, K2)
        z3 = jnp.dot(w3_ref[...], s_ref[0:K3, :],
                     preferred_element_type=jnp.float32) + b3_ref[...]
        o3 = jnp.where(z3 > 0, z3, alpha_ref[2] * z3)             # (C, HW)

        # ---- residual add + lane-dense store ---------------------------------
        out_ref[0] = (o3 + x).astype(out_ref.dtype)

    return kernel, K3


# ----------------------------- host-side helpers ----------------------------
def _pack_conv_weights(w_oihw, group_sizes):
    """(Cout, Cin, 3, 3) OIHW -> (Cout, 9*Cin) matching the im2col row layout:
    group-major, then tap (kh*3+kw), then channel-within-group."""
    cout = w_oihw.shape[0]
    pieces = []
    off = 0
    for g in group_sizes:
        wg = w_oihw[:, off:off + g, :, :]                         # (Cout, g, 3, 3)
        wg = jnp.transpose(wg, (0, 2, 3, 1)).reshape(cout, 9 * g)  # (kh,kw,ci) order
        pieces.append(wg)
        off += g
    return jnp.concatenate(pieces, axis=1).astype(jnp.float32)


def _tap_masks(H, W):
    """(9, H*W) float 0/1 masks: 1 where the tap's source pixel is inside the image."""
    idx = jnp.arange(H * W, dtype=jnp.int32)
    r = idx // W
    c = idx % W
    rows = []
    for kh in range(3):
        for kw in range(3):
            dh, dw = kh - 1, kw - 1
            ok = (r + dh >= 0) & (r + dh < H) & (c + dw >= 0) & (c + dw < W)
            rows.append(ok.astype(jnp.float32))
    return jnp.stack(rows, axis=0)


# ----------------------------- public forward -------------------------------
@jax.jit
def m_block_forward(x_nchw, params):
    """Forward pass of _M_block. x_nchw: (N, C, H, W) float32 -> (N, C, H, W)."""
    N, C, H, W = x_nchw.shape
    assert C % 2 == 0, "channel_in must be even (matches int(channel_in/2) conv sizes)"
    HW = H * W
    Ch = C // 2

    x_flat = x_nchw.astype(jnp.float32).reshape(N, C, HW)

    w1 = _pack_conv_weights(params["w1"], (C,))            # (Ch, 9C)
    w2 = _pack_conv_weights(params["w2"], (C, Ch))         # (Ch, 9*(3C/2))
    w3 = _pack_conv_weights(params["w3"], (C, Ch, Ch))     # (C, 9*2C)
    b1 = params["b1"].reshape(Ch, 1).astype(jnp.float32)
    b2 = params["b2"].reshape(Ch, 1).astype(jnp.float32)
    b3 = params["b3"].reshape(C, 1).astype(jnp.float32)
    alphas = jnp.stack([params["a1"], params["a2"],
                        params["a3"]]).astype(jnp.float32)  # (3,) shared PReLU alphas
    masks = _tap_masks(H, W)                                # (9, HW)

    kernel, s_rows = _make_mblock_kernel(C, H, W)

    out_flat = pl.pallas_call(
        kernel,
        out_shape=jax.ShapeDtypeStruct((N, C, HW), jnp.float32),
        grid_spec=pltpu.PrefetchScalarGridSpec(
            num_scalar_prefetch=0,
            grid=(N,),
            in_specs=[
                pl.BlockSpec((1, C, HW), lambda n: (n, 0, 0)),          # x
                pl.BlockSpec((9, HW), lambda n: (0, 0)),                # halo masks
                pl.BlockSpec((Ch, 9 * C), lambda n: (0, 0)),            # w1
                pl.BlockSpec((Ch, 1), lambda n: (0, 0)),                # b1
                pl.BlockSpec((Ch, 9 * (C + Ch)), lambda n: (0, 0)),     # w2
                pl.BlockSpec((Ch, 1), lambda n: (0, 0)),                # b2
                pl.BlockSpec((C, 9 * 2 * C), lambda n: (0, 0)),         # w3
                pl.BlockSpec((C, 1), lambda n: (0, 0)),                 # b3
                pl.BlockSpec(memory_space=pltpu.MemorySpace.SMEM),      # alphas
            ],
            out_specs=pl.BlockSpec((1, C, HW), lambda n: (n, 0, 0)),
            scratch_shapes=[pltpu.VMEM((s_rows, HW), jnp.float32)],
        ),
        compiler_params=pltpu.CompilerParams(
            dimension_semantics=("parallel",)),
    )(x_flat, masks, w1, b1, w2, b2, w3, b3, alphas)

    return out_flat.reshape(N, C, H, W)


# ----------------------------- parameter init -------------------------------
def init_m_block_params(channel_in, key):
    """Deterministic synthetic parameters matching _M_block.__init__ shapes.

    Conv weights are stored in PyTorch OIHW layout (Cout, Cin, 3, 3).
    PReLU uses the PyTorch default: a single shared parameter, init 0.25.
    """
    c_half = channel_in // 2
    shapes = [
        (c_half, channel_in, 3, 3),                 # conv_1
        (c_half, channel_in + c_half, 3, 3),        # conv_2
        (channel_in, channel_in * 2, 3, 3),         # conv_3
    ]
    params = {}
    keys = jax.random.split(key, 6)
    for i, shp in enumerate(shapes):
        fan_in = shp[1] * shp[2] * shp[3]
        bound = 1.0 / jnp.sqrt(fan_in)
        params[f"w{i+1}"] = jax.random.uniform(
            keys[2 * i], shp, jnp.float32, -bound, bound)
        params[f"b{i+1}"] = jax.random.uniform(
            keys[2 * i + 1], (shp[0],), jnp.float32, -bound, bound)
        params[f"a{i+1}"] = jnp.float32(0.25)
    return params


# ---------------- pure-JAX reference for correctness check ------------------
def _ref_forward(x, p):
    def conv_prelu(inp, w, b, a):
        y = jax.lax.conv_general_dilated(
            inp, w, window_strides=(1, 1), padding="SAME",
            dimension_numbers=("NCHW", "OIHW", "NCHW"),
            precision=jax.lax.Precision.HIGHEST)
        y = y + b[None, :, None, None]
        return jnp.where(y > 0, y, a * y)

    o1 = conv_prelu(x, p["w1"], p["b1"], p["a1"])
    c1 = jnp.concatenate([x, o1], axis=1)
    o2 = conv_prelu(c1, p["w2"], p["b2"], p["a2"])
    c2 = jnp.concatenate([c1, o2], axis=1)
    o3 = conv_prelu(c2, p["w3"], p["b3"], p["a3"])
    return o3 + x


if __name__ == "__main__":
    key = jax.random.PRNGKey(0)
    k_x, k_p = jax.random.split(key)

    N, C, H, W = 2, 4, 16, 16
    x = jax.random.normal(k_x, (N, C, H, W), dtype=jnp.float32)
    params = init_m_block_params(C, k_p)

    out = jax.block_until_ready(m_block_forward(x, params))
    ref = jax.block_until_ready(_ref_forward(x, params))

    assert out.shape == (N, C, H, W)
    assert jnp.max(jnp.abs(out - ref)) < 1e-4

    print("KERNEL_OK")
</pallas_src>

<mosaic_0001>
module attributes {stable_mosaic.version = 11 : i64} {
  func.func @kernel(%arg0: i32, %arg1: memref<1x4x256xf32, #tpu.memory_space<vmem>>, %arg2: memref<9x256xf32, #tpu.memory_space<vmem>>, %arg3: memref<2x36xf32, #tpu.memory_space<vmem>>, %arg4: memref<2x1xf32, #tpu.memory_space<vmem>>, %arg5: memref<2x54xf32, #tpu.memory_space<vmem>>, %arg6: memref<2x1xf32, #tpu.memory_space<vmem>>, %arg7: memref<4x72xf32, #tpu.memory_space<vmem>>, %arg8: memref<4x1xf32, #tpu.memory_space<vmem>>, %arg9: memref<3xf32, #tpu.memory_space<smem>>, %arg10: memref<1x4x256xf32, #tpu.memory_space<vmem>>, %arg11: memref<72x256xf32, #tpu.memory_space<vmem>>) attributes {dimension_semantics = [#tpu.dimension_semantics<parallel>], iteration_bounds = array<i64: 2>, scalar_prefetch = 0 : i64, scratch_operands = 1 : i64, tpu.core_type = #tpu.core_type<tc>, window_params = [{transform_indices = @transform_0, window_bounds = array<i64: 1, 4, 256>}, {pipeline_mode = #tpu.pipeline_mode<synchronous>, transform_indices = @transform_1, window_bounds = array<i64: 9, 256>}, {pipeline_mode = #tpu.pipeline_mode<synchronous>, transform_indices = @transform_2, window_bounds = array<i64: 2, 36>}, {pipeline_mode = #tpu.pipeline_mode<synchronous>, transform_indices = @transform_3, window_bounds = array<i64: 2, 1>}, {pipeline_mode = #tpu.pipeline_mode<synchronous>, transform_indices = @transform_4, window_bounds = array<i64: 2, 54>}, {pipeline_mode = #tpu.pipeline_mode<synchronous>, transform_indices = @transform_5, window_bounds = array<i64: 2, 1>}, {pipeline_mode = #tpu.pipeline_mode<synchronous>, transform_indices = @transform_6, window_bounds = array<i64: 4, 72>}, {pipeline_mode = #tpu.pipeline_mode<synchronous>, transform_indices = @transform_7, window_bounds = array<i64: 4, 1>}, {transform_indices = @transform_8, window_bounds = array<i64: 3>}, {transform_indices = @transform_9, window_bounds = array<i64: 1, 4, 256>}]} {
    %cst = arith.constant 0.000000e+00 : f32
    %0 = vector.broadcast %cst : f32 to vector<72x256xf32>
    %c0 = arith.constant 0 : index
    %c0_0 = arith.constant 0 : index
    %1 = vector.load %arg11[%c0, %c0_0] : memref<72x256xf32, #tpu.memory_space<vmem>>, vector<72x256xf32>
    tpu.vector_store %arg11[%c0, %c0_0], %0 {strides = array<i32>} : memref<72x256xf32, #tpu.memory_space<vmem>>, vector<72x256xf32>,
    %c0_1 = arith.constant 0 : index
    %c0_2 = arith.constant 0 : index
    %c0_3 = arith.constant 0 : index
    %2 = vector.load %arg1[%c0_1, %c0_2, %c0_3] : memref<1x4x256xf32, #tpu.memory_space<vmem>>, vector<1x4x256xf32>
    %3 = vector.shape_cast %2 : vector<1x4x256xf32> to vector<4x256xf32>
    %4 = vector.extract_strided_slice %3 {offsets = [0, 0], sizes = [4, 239], strides = [1, 1]} : vector<4x256xf32> to vector<4x239xf32>
    %c0_4 = arith.constant 0 : index
    %c17 = arith.constant 17 : index
    %5 = vector.load %arg2[%c0_4, %c17] : memref<9x256xf32, #tpu.memory_space<vmem>>, vector<1x239xf32>
    %6 = vector.broadcast %5 : vector<1x239xf32> to vector<4x239xf32>
    %7 = arith.mulf %4, %6 : vector<4x239xf32>
    %c0_5 = arith.constant 0 : index
    %c17_6 = arith.constant 17 : index
    %8 = vector.load %arg11[%c0_5, %c17_6] : memref<72x256xf32, #tpu.memory_space<vmem>>, vector<4x239xf32>
    tpu.vector_store %arg11[%c0_5, %c17_6], %7 {strides = array<i32>} : memref<72x256xf32, #tpu.memory_space<vmem>>, vector<4x239xf32>,
    %9 = vector.extract_strided_slice %3 {offsets = [0, 0], sizes = [4, 240], strides = [1, 1]} : vector<4x256xf32> to vector<4x240xf32>
    %c1 = arith.constant 1 : index
    %c16 = arith.constant 16 : index
    %10 = vector.load %arg2[%c1, %c16] : memref<9x256xf32, #tpu.memory_space<vmem>>, vector<1x240xf32>
    %11 = vector.broadcast %10 : vector<1x240xf32> to vector<4x240xf32>
    %12 = arith.mulf %9, %11 : vector<4x240xf32>
    %c4 = arith.constant 4 : index
    %c16_7 = arith.constant 16 : index
    %13 = vector.load %arg11[%c4, %c16_7] : memref<72x256xf32, #tpu.memory_space<vmem>>, vector<4x240xf32>
    tpu.vector_store %arg11[%c4, %c16_7], %12 {strides = array<i32>} : memref<72x256xf32, #tpu.memory_space<vmem>>, vector<4x240xf32>,
    %14 = vector.extract_strided_slice %3 {offsets = [0, 0], sizes = [4, 241], strides = [1, 1]} : vector<4x256xf32> to vector<4x241xf32>
    %c2 = arith.constant 2 : index
    %c15 = arith.constant 15 : index
    %15 = vector.load %arg2[%c2, %c15] : memref<9x256xf32, #tpu.memory_space<vmem>>, vector<1x241xf32>
    %16 = vector.broadcast %15 : vector<1x241xf32> to vector<4x241xf32>
    %17 = arith.mulf %14, %16 : vector<4x241xf32>
    %c8 = arith.constant 8 : index
    %c15_8 = arith.constant 15 : index
    %18 = vector.load %arg11[%c8, %c15_8] : memref<72x256xf32, #tpu.memory_space<vmem>>, vector<4x241xf32>
    tpu.vector_store %arg11[%c8, %c15_8], %17 {strides = array<i32>} : memref<72x256xf32, #tpu.memory_space<vmem>>, vector<4x241xf32>,
    %19 = vector.extract_strided_slice %3 {offsets = [0, 0], sizes = [4, 255], strides = [1, 1]} : vector<4x256xf32> to vector<4x255xf32>
    %c3 = arith.constant 3 : index
    %c1_9 = arith.constant 1 : index
    %20 = vector.load %arg2[%c3, %c1_9] : memref<9x256xf32, #tpu.memory_space<vmem>>, vector<1x255xf32>
    %21 = vector.broadcast %20 : vector<1x255xf32> to vector<4x255xf32>
    %22 = arith.mulf %19, %21 : vector<4x255xf32>
    %c12 = arith.constant 12 : index
    %c1_10 = arith.constant 1 : index
    %23 = vector.load %arg11[%c12, %c1_10] : memref<72x256xf32, #tpu.memory_space<vmem>>, vector<4x255xf32>
    tpu.vector_store %arg11[%c12, %c1_10], %22 {strides = array<i32>} : memref<72x256xf32, #tpu.memory_space<vmem>>, vector<4x255xf32>,
    %c16_11 = arith.constant 16 : index
    %c0_12 = arith.constant 0 : index
    %24 = vector.load %arg11[%c16_11, %c0_12] : memref<72x256xf32, #tpu.memory_space<vmem>>, vector<4x256xf32>
    tpu.vector_store %arg11[%c16_11, %c0_12], %3 {strides = array<i32>} : memref<72x256xf32, #tpu.memory_space<vmem>>, vector<4x256xf32>,
    %25 = vector.extract_strided_slice %3 {offsets = [0, 1], sizes = [4, 255], strides = [1, 1]} : vector<4x256xf32> to vector<4x255xf32>
    %c5 = arith.constant 5 : index
    %c0_13 = arith.constant 0 : index
    %26 = vector.load %arg2[%c5, %c0_13] : memref<9x256xf32, #tpu.memory_space<vmem>>, vector<1x255xf32>
    %27 = vector.broadcast %26 : vector<1x255xf32> to vector<4x255xf32>
    %28 = arith.mulf %25, %27 : vector<4x255xf32>
    %c20 = arith.constant 20 : index
    %c0_14 = arith.constant 0 : index
    %29 = vector.load %arg11[%c20, %c0_14] : memref<72x256xf32, #tpu.memory_space<vmem>>, vector<4x255xf32>
    tpu.vector_store %arg11[%c20, %c0_14], %28 {strides = array<i32>} : memref<72x256xf32, #tpu.memory_space<vmem>>, vector<4x255xf32>,
    %30 = vector.extract_strided_slice %3 {offsets = [0, 15], sizes = [4, 241], strides = [1, 1]} : vector<4x256xf32> to vector<4x241xf32>
    %c6 = arith.constant 6 : index
    %c0_15 = arith.constant 0 : index
    %31 = vector.load %arg2[%c6, %c0_15] : memref<9x256xf32, #tpu.memory_space<vmem>>, vector<1x241xf32>
    %32 = vector.broadcast %31 : vector<1x241xf32> to vector<4x241xf32>
    %33 = arith.mulf %30, %32 : vector<4x241xf32>
    %c24 = arith.constant 24 : index
    %c0_16 = arith.constant 0 : index
    %34 = vector.load %arg11[%c24, %c0_16] : memref<72x256xf32, #tpu.memory_space<vmem>>, vector<4x241xf32>
    tpu.vector_store %arg11[%c24, %c0_16], %33 {strides = array<i32>} : memref<72x256xf32, #tpu.memory_space<vmem>>, vector<4x241xf32>,
    %35 = vector.extract_strided_slice %3 {offsets = [0, 16], sizes = [4, 240], strides = [1, 1]} : vector<4x256xf32> to vector<4x240xf32>
    %c7 = arith.constant 7 : index
    %c0_17 = arith.constant 0 : index
    %36 = vector.load %arg2[%c7, %c0_17] : memref<9x256xf32, #tpu.memory_space<vmem>>, vector<1x240xf32>
    %37 = vector.broadcast %36 : vector<1x240xf32> to vector<4x240xf32>
    %38 = arith.mulf %35, %37 : vector<4x240xf32>
    %c28 = arith.constant 28 : index
    %c0_18 = arith.constant 0 : index
    %39 = vector.load %arg11[%c28, %c0_18] : memref<72x256xf32, #tpu.memory_space<vmem>>, vector<4x240xf32>
    tpu.vector_store %arg11[%c28, %c0_18], %38 {strides = array<i32>} : memref<72x256xf32, #tpu.memory_space<vmem>>, vector<4x240xf32>,
    %40 = vector.extract_strided_slice %3 {offsets = [0, 17], sizes = [4, 239], strides = [1, 1]} : vector<4x256xf32> to vector<4x239xf32>
    %c8_19 = arith.constant 8 : index
    %c0_20 = arith.constant 0 : index
    %41 = vector.load %arg2[%c8_19, %c0_20] : memref<9x256xf32, #tpu.memory_space<vmem>>, vector<1x239xf32>
    %42 = vector.broadcast %41 : vector<1x239xf32> to vector<4x239xf32>
    %43 = arith.mulf %40, %42 : vector<4x239xf32>
    %c32 = arith.constant 32 : index
    %c0_21 = arith.constant 0 : index
    %44 = vector.load %arg11[%c32, %c0_21] : memref<72x256xf32, #tpu.memory_space<vmem>>, vector<4x239xf32>
    tpu.vector_store %arg11[%c32, %c0_21], %43 {strides = array<i32>} : memref<72x256xf32, #tpu.memory_space<vmem>>, vector<4x239xf32>,
    %c0_22 = arith.constant 0 : index
    %c0_23 = arith.constant 0 : index
    %45 = vector.load %arg3[%c0_22, %c0_23] : memref<2x36xf32, #tpu.memory_space<vmem>>, vector<2x36xf32>
    %c0_24 = arith.constant 0 : index
    %c0_25 = arith.constant 0 : index
    %46 = vector.load %arg11[%c0_24, %c0_25] : memref<72x256xf32, #tpu.memory_space<vmem>>, vector<36x256xf32>
    %cst_26 = arith.constant dense<0.000000e+00> : vector<2x256xf32>
    %47 = tpu.matmul %45, %46, %cst_26 {dimension_numbers = #tpu.dot_dimension_numbers<[1], [0], [0], [1], [0, 0, 1, 1], [], []>} : vector<2x36xf32>, vector<36x256xf32>, vector<2x256xf32> -> vector<2x256xf32>
    %c0_27 = arith.constant 0 : index
    %c0_28 = arith.constant 0 : index
    %48 = vector.load %arg4[%c0_27, %c0_28] : memref<2x1xf32, #tpu.memory_space<vmem>>, vector<2x1xf32>
    %49 = vector.broadcast %48 : vector<2x1xf32> to vector<2x256xf32>
    %50 = arith.addf %47, %49 : vector<2x256xf32>
    %cst_29 = arith.constant 0.000000e+00 : f32
    %51 = vector.broadcast %cst_29 : f32 to vector<2x256xf32>
    %52 = arith.cmpf ogt, %50, %51 : vector<2x256xf32>
    %c0_30 = arith.constant 0 : index
    %53 = memref.load %arg9[%c0_30] : memref<3xf32, #tpu.memory_space<smem>>
    %54 = vector.broadcast %53 : f32 to vector<2x256xf32>
    %55 = arith.mulf %54, %50 : vector<2x256xf32>
    %56 = arith.select %52, %50, %55 : vector<2x256xi1>, vector<2x256xf32>
    %57 = vector.extract_strided_slice %56 {offsets = [0, 0], sizes = [2, 239], strides = [1, 1]} : vector<2x256xf32> to vector<2x239xf32>
    %c0_31 = arith.constant 0 : index
    %c17_32 = arith.constant 17 : index
    %58 = vector.load %arg2[%c0_31, %c17_32] : memref<9x256xf32, #tpu.memory_space<vmem>>, vector<1x239xf32>
    %59 = vector.broadcast %58 : vector<1x239xf32> to vector<2x239xf32>
    %60 = arith.mulf %57, %59 : vector<2x239xf32>
    %c36 = arith.constant 36 : index
    %c17_33 = arith.constant 17 : index
    %61 = vector.load %arg11[%c36, %c17_33] : memref<72x256xf32, #tpu.memory_space<vmem>>, vector<2x239xf32>
    tpu.vector_store %arg11[%c36, %c17_33], %60 {strides = array<i32>} : memref<72x256xf32, #tpu.memory_space<vmem>>, vector<2x239xf32>,
    %62 = vector.extract_strided_slice %56 {offsets = [0, 0], sizes = [2, 240], strides = [1, 1]} : vector<2x256xf32> to vector<2x240xf32>
    %c1_34 = arith.constant 1 : index
    %c16_35 = arith.constant 16 : index
    %63 = vector.load %arg2[%c1_34, %c16_35] : memref<9x256xf32, #tpu.memory_space<vmem>>, vector<1x240xf32>
    %64 = vector.broadcast %63 : vector<1x240xf32> to vector<2x240xf32>
    %65 = arith.mulf %62, %64 : vector<2x240xf32>
    %c38 = arith.constant 38 : index
    %c16_36 = arith.constant 16 : index
    %66 = vector.load %arg11[%c38, %c16_36] : memref<72x256xf32, #tpu.memory_space<vmem>>, vector<2x240xf32>
    tpu.vector_store %arg11[%c38, %c16_36], %65 {strides = array<i32>} : memref<72x256xf32, #tpu.memory_space<vmem>>, vector<2x240xf32>,
    %67 = vector.extract_strided_slice %56 {offsets = [0, 0], sizes = [2, 241], strides = [1, 1]} : vector<2x256xf32> to vector<2x241xf32>
    %c2_37 = arith.constant 2 : index
    %c15_38 = arith.constant 15 : index
    %68 = vector.load %arg2[%c2_37, %c15_38] : memref<9x256xf32, #tpu.memory_space<vmem>>, vector<1x241xf32>
    %69 = vector.broadcast %68 : vector<1x241xf32> to vector<2x241xf32>
    %70 = arith.mulf %67, %69 : vector<2x241xf32>
    %c40 = arith.constant 40 : index
    %c15_39 = arith.constant 15 : index
    %71 = vector.load %arg11[%c40, %c15_39] : memref<72x256xf32, #tpu.memory_space<vmem>>, vector<2x241xf32>
    tpu.vector_store %arg11[%c40, %c15_39], %70 {strides = array<i32>} : memref<72x256xf32, #tpu.memory_space<vmem>>, vector<2x241xf32>,
    %72 = vector.extract_strided_slice %56 {offsets = [0, 0], sizes = [2, 255], strides = [1, 1]} : vector<2x256xf32> to vector<2x255xf32>
    %c3_40 = arith.constant 3 : index
    %c1_41 = arith.constant 1 : index
    %73 = vector.load %arg2[%c3_40, %c1_41] : memref<9x256xf32, #tpu.memory_space<vmem>>, vector<1x255xf32>
    %74 = vector.broadcast %73 : vector<1x255xf32> to vector<2x255xf32>
    %75 = arith.mulf %72, %74 : vector<2x255xf32>
    %c42 = arith.constant 42 : index
    %c1_42 = arith.constant 1 : index
    %76 = vector.load %arg11[%c42, %c1_42] : memref<72x256xf32, #tpu.memory_space<vmem>>, vector<2x255xf32>
    tpu.vector_store %arg11[%c42, %c1_42], %75 {strides = array<i32>} : memref<72x256xf32, #tpu.memory_space<vmem>>, vector<2x255xf32>,
    %c44 = arith.constant 44 : index
    %c0_43 = arith.constant 0 : index
    %77 = vector.load %arg11[%c44, %c0_43] : memref<72x256xf32, #tpu.memory_space<vmem>>, vector<2x256xf32>
    tpu.vector_store %arg11[%c44, %c0_43], %56 {strides = array<i32>} : memref<72x256xf32, #tpu.memory_space<vmem>>, vector<2x256xf32>,
    %78 = vector.extract_strided_slice %56 {offsets = [0, 1], sizes = [2, 255], strides = [1, 1]} : vector<2x256xf32> to vector<2x255xf32>
    %c5_44 = arith.constant 5 : index
    %c0_45 = arith.constant 0 : index
    %79 = vector.load %arg2[%c5_44, %c0_45] : memref<9x256xf32, #tpu.memory_space<vmem>>, vector<1x255xf32>
    %80 = vector.broadcast %79 : vector<1x255xf32> to vector<2x255xf32>
    %81 = arith.mulf %78, %80 : vector<2x255xf32>
    %c46 = arith.constant 46 : index
    %c0_46 = arith.constant 0 : index
    %82 = vector.load %arg11[%c46, %c0_46] : memref<72x256xf32, #tpu.memory_space<vmem>>, vector<2x255xf32>
    tpu.vector_store %arg11[%c46, %c0_46], %81 {strides = array<i32>} : memref<72x256xf32, #tpu.memory_space<vmem>>, vector<2x255xf32>,
    %83 = vector.extract_strided_slice %56 {offsets = [0, 15], sizes = [2, 241], strides = [1, 1]} : vector<2x256xf32> to vector<2x241xf32>
    %c6_47 = arith.constant 6 : index
    %c0_48 = arith.constant 0 : index
    %84 = vector.load %arg2[%c6_47, %c0_48] : memref<9x256xf32, #tpu.memory_space<vmem>>, vector<1x241xf32>
    %85 = vector.broadcast %84 : vector<1x241xf32> to vector<2x241xf32>
    %86 = arith.mulf %83, %85 : vector<2x241xf32>
    %c48 = arith.constant 48 : index
    %c0_49 = arith.constant 0 : index
    %87 = vector.load %arg11[%c48, %c0_49] : memref<72x256xf32, #tpu.memory_space<vmem>>, vector<2x241xf32>
    tpu.vector_store %arg11[%c48, %c0_49], %86 {strides = array<i32>} : memref<72x256xf32, #tpu.memory_space<vmem>>, vector<2x241xf32>,
    %88 = vector.extract_strided_slice %56 {offsets = [0, 16], sizes = [2, 240], strides = [1, 1]} : vector<2x256xf32> to vector<2x240xf32>
    %c7_50 = arith.constant 7 : index
    %c0_51 = arith.constant 0 : index
    %89 = vector.load %arg2[%c7_50, %c0_51] : memref<9x256xf32, #tpu.memory_space<vmem>>, vector<1x240xf32>
    %90 = vector.broadcast %89 : vector<1x240xf32> to vector<2x240xf32>
    %91 = arith.mulf %88, %90 : vector<2x240xf32>
    %c50 = arith.constant 50 : index
    %c0_52 = arith.constant 0 : index
    %92 = vector.load %arg11[%c50, %c0_52] : memref<72x256xf32, #tpu.memory_space<vmem>>, vector<2x240xf32>
    tpu.vector_store %arg11[%c50, %c0_52], %91 {strides = array<i32>} : memref<72x256xf32, #tpu.memory_space<vmem>>, vector<2x240xf32>,
    %93 = vector.extract_strided_slice %56 {offsets = [0, 17], sizes = [2, 239], strides = [1, 1]} : vector<2x256xf32> to vector<2x239xf32>
    %c8_53 = arith.constant 8 : index
    %c0_54 = arith.constant 0 : index
    %94 = vector.load %arg2[%c8_53, %c0_54] : memref<9x256xf32, #tpu.memory_space<vmem>>, vector<1x239xf32>
    %95 = vector.broadcast %94 : vector<1x239xf32> to vector<2x239xf32>
    %96 = arith.mulf %93, %95 : vector<2x239xf32>
    %c52 = arith.constant 52 : index
    %c0_55 = arith.constant 0 : index
    %97 = vector.load %arg11[%c52, %c0_55] : memref<72x256xf32, #tpu.memory_space<vmem>>, vector<2x239xf32>
    tpu.vector_store %arg11[%c52, %c0_55], %96 {strides = array<i32>} : memref<72x256xf32, #tpu.memory_space<vmem>>, vector<2x239xf32>,
    %c0_56 = arith.constant 0 : index
    %c0_57 = arith.constant 0 : index
    %98 = vector.load %arg5[%c0_56, %c0_57] : memref<2x54xf32, #tpu.memory_space<vmem>>, vector<2x54xf32>
    %c0_58 = arith.constant 0 : index
    %c0_59 = arith.constant 0 : index
    %99 = vector.load %arg11[%c0_58, %c0_59] : memref<72x256xf32, #tpu.memory_space<vmem>>, vector<54x256xf32>
    %cst_60 = arith.constant dense<0.000000e+00> : vector<2x256xf32>
    %100 = tpu.matmul %98, %99, %cst_60 {dimension_numbers = #tpu.dot_dimension_numbers<[1], [0], [0], [1], [0, 0, 1, 1], [], []>} : vector<2x54xf32>, vector<54x256xf32>, vector<2x256xf32> -> vector<2x256xf32>
    %c0_61 = arith.constant 0 : index
    %c0_62 = arith.constant 0 : index
    %101 = vector.load %arg6[%c0_61, %c0_62] : memref<2x1xf32, #tpu.memory_space<vmem>>, vector<2x1xf32>
    %102 = vector.broadcast %101 : vector<2x1xf32> to vector<2x256xf32>
    %103 = arith.addf %100, %102 : vector<2x256xf32>
    %cst_63 = arith.constant 0.000000e+00 : f32
    %104 = vector.broadcast %cst_63 : f32 to vector<2x256xf32>
    %105 = arith.cmpf ogt, %103, %104 : vector<2x256xf32>
    %c1_64 = arith.constant 1 : index
    %106 = memref.load %arg9[%c1_64] : memref<3xf32, #tpu.memory_space<smem>>
    %107 = vector.broadcast %106 : f32 to vector<2x256xf32>
    %108 = arith.mulf %107, %103 : vector<2x256xf32>
    %109 = arith.select %105, %103, %108 : vector<2x256xi1>, vector<2x256xf32>
    %110 = vector.extract_strided_slice %109 {offsets = [0, 0], sizes = [2, 239], strides = [1, 1]} : vector<2x256xf32> to vector<2x239xf32>
    %c0_65 = arith.constant 0 : index
    %c17_66 = arith.constant 17 : index
    %111 = vector.load %arg2[%c0_65, %c17_66] : memref<9x256xf32, #tpu.memory_space<vmem>>, vector<1x239xf32>
    %112 = vector.broadcast %111 : vector<1x239xf32> to vector<2x239xf32>
    %113 = arith.mulf %110, %112 : vector<2x239xf32>
    %c54 = arith.constant 54 : index
    %c17_67 = arith.constant 17 : index
    %114 = vector.load %arg11[%c54, %c17_67] : memref<72x256xf32, #tpu.memory_space<vmem>>, vector<2x239xf32>
    tpu.vector_store %arg11[%c54, %c17_67], %113 {strides = array<i32>} : memref<72x256xf32, #tpu.memory_space<vmem>>, vector<2x239xf32>,
    %115 = vector.extract_strided_slice %109 {offsets = [0, 0], sizes = [2, 240], strides = [1, 1]} : vector<2x256xf32> to vector<2x240xf32>
    %c1_68 = arith.constant 1 : index
    %c16_69 = arith.constant 16 : index
    %116 = vector.load %arg2[%c1_68, %c16_69] : memref<9x256xf32, #tpu.memory_space<vmem>>, vector<1x240xf32>
    %117 = vector.broadcast %116 : vector<1x240xf32> to vector<2x240xf32>
    %118 = arith.mulf %115, %117 : vector<2x240xf32>
    %c56 = arith.constant 56 : index
    %c16_70 = arith.constant 16 : index
    %119 = vector.load %arg11[%c56, %c16_70] : memref<72x256xf32, #tpu.memory_space<vmem>>, vector<2x240xf32>
    tpu.vector_store %arg11[%c56, %c16_70], %118 {strides = array<i32>} : memref<72x256xf32, #tpu.memory_space<vmem>>, vector<2x240xf32>,
    %120 = vector.extract_strided_slice %109 {offsets = [0, 0], sizes = [2, 241], strides = [1, 1]} : vector<2x256xf32> to vector<2x241xf32>
    %c2_71 = arith.constant 2 : index
    %c15_72 = arith.constant 15 : index
    %121 = vector.load %arg2[%c2_71, %c15_72] : memref<9x256xf32, #tpu.memory_space<vmem>>, vector<1x241xf32>
    %122 = vector.broadcast %121 : vector<1x241xf32> to vector<2x241xf32>
    %123 = arith.mulf %120, %122 : vector<2x241xf32>
    %c58 = arith.constant 58 : index
    %c15_73 = arith.constant 15 : index
    %124 = vector.load %arg11[%c58, %c15_73] : memref<72x256xf32, #tpu.memory_space<vmem>>, vector<2x241xf32>
    tpu.vector_store %arg11[%c58, %c15_73], %123 {strides = array<i32>} : memref<72x256xf32, #tpu.memory_space<vmem>>, vector<2x241xf32>,
    %125 = vector.extract_strided_slice %109 {offsets = [0, 0], sizes = [2, 255], strides = [1, 1]} : vector<2x256xf32> to vector<2x255xf32>
    %c3_74 = arith.constant 3 : index
    %c1_75 = arith.constant 1 : index
    %126 = vector.load %arg2[%c3_74, %c1_75] : memref<9x256xf32, #tpu.memory_space<vmem>>, vector<1x255xf32>
    %127 = vector.broadcast %126 : vector<1x255xf32> to vector<2x255xf32>
    %128 = arith.mulf %125, %127 : vector<2x255xf32>
    %c60 = arith.constant 60 : index
    %c1_76 = arith.constant 1 : index
    %129 = vector.load %arg11[%c60, %c1_76] : memref<72x256xf32, #tpu.memory_space<vmem>>, vector<2x255xf32>
    tpu.vector_store %arg11[%c60, %c1_76], %128 {strides = array<i32>} : memref<72x256xf32, #tpu.memory_space<vmem>>, vector<2x255xf32>,
    %c62 = arith.constant 62 : index
    %c0_77 = arith.constant 0 : index
    %130 = vector.load %arg11[%c62, %c0_77] : memref<72x256xf32, #tpu.memory_space<vmem>>, vector<2x256xf32>
    tpu.vector_store %arg11[%c62, %c0_77], %109 {strides = array<i32>} : memref<72x256xf32, #tpu.memory_space<vmem>>, vector<2x256xf32>,
    %131 = vector.extract_strided_slice %109 {offsets = [0, 1], sizes = [2, 255], strides = [1, 1]} : vector<2x256xf32> to vector<2x255xf32>
    %c5_78 = arith.constant 5 : index
    %c0_79 = arith.constant 0 : index
    %132 = vector.load %arg2[%c5_78, %c0_79] : memref<9x256xf32, #tpu.memory_space<vmem>>, vector<1x255xf32>
    %133 = vector.broadcast %132 : vector<1x255xf32> to vector<2x255xf32>
    %134 = arith.mulf %131, %133 : vector<2x255xf32>
    %c64 = arith.constant 64 : index
    %c0_80 = arith.constant 0 : index
    %135 = vector.load %arg11[%c64, %c0_80] : memref<72x256xf32, #tpu.memory_space<vmem>>, vector<2x255xf32>
    tpu.vector_store %arg11[%c64, %c0_80], %134 {strides = array<i32>} : memref<72x256xf32, #tpu.memory_space<vmem>>, vector<2x255xf32>,
    %136 = vector.extract_strided_slice %109 {offsets = [0, 15], sizes = [2, 241], strides = [1, 1]} : vector<2x256xf32> to vector<2x241xf32>
    %c6_81 = arith.constant 6 : index
    %c0_82 = arith.constant 0 : index
    %137 = vector.load %arg2[%c6_81, %c0_82] : memref<9x256xf32, #tpu.memory_space<vmem>>, vector<1x241xf32>
    %138 = vector.broadcast %137 : vector<1x241xf32> to vector<2x241xf32>
    %139 = arith.mulf %136, %138 : vector<2x241xf32>
    %c66 = arith.constant 66 : index
    %c0_83 = arith.constant 0 : index
    %140 = vector.load %arg11[%c66, %c0_83] : memref<72x256xf32, #tpu.memory_space<vmem>>, vector<2x241xf32>
    tpu.vector_store %arg11[%c66, %c0_83], %139 {strides = array<i32>} : memref<72x256xf32, #tpu.memory_space<vmem>>, vector<2x241xf32>,
    %141 = vector.extract_strided_slice %109 {offsets = [0, 16], sizes = [2, 240], strides = [1, 1]} : vector<2x256xf32> to vector<2x240xf32>
    %c7_84 = arith.constant 7 : index
    %c0_85 = arith.constant 0 : index
    %142 = vector.load %arg2[%c7_84, %c0_85] : memref<9x256xf32, #tpu.memory_space<vmem>>, vector<1x240xf32>
    %143 = vector.broadcast %142 : vector<1x240xf32> to vector<2x240xf32>
    %144 = arith.mulf %141, %143 : vector<2x240xf32>
    %c68 = arith.constant 68 : index
    %c0_86 = arith.constant 0 : index
    %145 = vector.load %arg11[%c68, %c0_86] : memref<72x256xf32, #tpu.memory_space<vmem>>, vector<2x240xf32>
    tpu.vector_store %arg11[%c68, %c0_86], %144 {strides = array<i32>} : memref<72x256xf32, #tpu.memory_space<vmem>>, vector<2x240xf32>,
    %146 = vector.extract_strided_slice %109 {offsets = [0, 17], sizes = [2, 239], strides = [1, 1]} : vector<2x256xf32> to vector<2x239xf32>
    %c8_87 = arith.constant 8 : index
    %c0_88 = arith.constant 0 : index
    %147 = vector.load %arg2[%c8_87, %c0_88] : memref<9x256xf32, #tpu.memory_space<vmem>>, vector<1x239xf32>
    %148 = vector.broadcast %147 : vector<1x239xf32> to vector<2x239xf32>
    %149 = arith.mulf %146, %148 : vector<2x239xf32>
    %c70 = arith.constant 70 : index
    %c0_89 = arith.constant 0 : index
    %150 = vector.load %arg11[%c70, %c0_89] : memref<72x256xf32, #tpu.memory_space<vmem>>, vector<2x239xf32>
    tpu.vector_store %arg11[%c70, %c0_89], %149 {strides = array<i32>} : memref<72x256xf32, #tpu.memory_space<vmem>>, vector<2x239xf32>,
    %c0_90 = arith.constant 0 : index
    %c0_91 = arith.constant 0 : index
    %151 = vector.load %arg7[%c0_90, %c0_91] : memref<4x72xf32, #tpu.memory_space<vmem>>, vector<4x72xf32>
    %c0_92 = arith.constant 0 : index
    %c0_93 = arith.constant 0 : index
    %152 = vector.load %arg11[%c0_92, %c0_93] : memref<72x256xf32, #tpu.memory_space<vmem>>, vector<72x256xf32>
    %cst_94 = arith.constant dense<0.000000e+00> : vector<4x256xf32>
    %153 = tpu.matmul %151, %152, %cst_94 {dimension_numbers = #tpu.dot_dimension_numbers<[1], [0], [0], [1], [0, 0, 1, 1], [], []>} : vector<4x72xf32>, vector<72x256xf32>, vector<4x256xf32> -> vector<4x256xf32>
    %c0_95 = arith.constant 0 : index
    %c0_96 = arith.constant 0 : index
    %154 = vector.load %arg8[%c0_95, %c0_96] : memref<4x1xf32, #tpu.memory_space<vmem>>, vector<4x1xf32>
    %155 = vector.broadcast %154 : vector<4x1xf32> to vector<4x256xf32>
    %156 = arith.addf %153, %155 : vector<4x256xf32>
    %cst_97 = arith.constant 0.000000e+00 : f32
    %157 = vector.broadcast %cst_97 : f32 to vector<4x256xf32>
    %158 = arith.cmpf ogt, %156, %157 : vector<4x256xf32>
    %c2_98 = arith.constant 2 : index
    %159 = memref.load %arg9[%c2_98] : memref<3xf32, #tpu.memory_space<smem>>
    %160 = vector.broadcast %159 : f32 to vector<4x256xf32>
    %161 = arith.mulf %160, %156 : vector<4x256xf32>
    %162 = arith.select %158, %156, %161 : vector<4x256xi1>, vector<4x256xf32>
    %163 = arith.addf %162, %3 : vector<4x256xf32>
    %c0_99 = arith.constant 0 : index
    %c0_100 = arith.constant 0 : index
    %c0_101 = arith.constant 0 : index
    %164 = vector.load %arg10[%c0_99, %c0_100, %c0_101] : memref<1x4x256xf32, #tpu.memory_space<vmem>>, vector<1x4x256xf32>
    %165 = vector.shape_cast %164 : vector<1x4x256xf32> to vector<4x256xf32>
    %166 = vector.shape_cast %163 : vector<4x256xf32> to vector<1x4x256xf32>
    tpu.vector_store %arg10[%c0_99, %c0_100, %c0_101], %166 {strides = array<i32>} : memref<1x4x256xf32, #tpu.memory_space<vmem>>, vector<1x4x256xf32>,
    return
  }
  func.func @transform_0(%arg0: i32) -> (i32, i32, i32) {
    %c0_i32 = arith.constant 0 : i32
    %c0_i32_0 = arith.constant 0 : i32
    %c0_i32_1 = arith.constant 0 : i32
    return %arg0, %c0_i32, %c0_i32_0 : i32, i32, i32
  }
  func.func @transform_1(%arg0: i32) -> (i32, i32) {
    %c0_i32 = arith.constant 0 : i32
    %c0_i32_0 = arith.constant 0 : i32
    %c0_i32_1 = arith.constant 0 : i32
    return %c0_i32, %c0_i32_0 : i32, i32
  }
  func.func @transform_2(%arg0: i32) -> (i32, i32) {
    %c0_i32 = arith.constant 0 : i32
    %c0_i32_0 = arith.constant 0 : i32
    %c0_i32_1 = arith.constant 0 : i32
    return %c0_i32, %c0_i32_0 : i32, i32
  }
  func.func @transform_3(%arg0: i32) -> (i32, i32) {
    %c0_i32 = arith.constant 0 : i32
    %c0_i32_0 = arith.constant 0 : i32
    %c0_i32_1 = arith.constant 0 : i32
    return %c0_i32, %c0_i32_0 : i32, i32
  }
  func.func @transform_4(%arg0: i32) -> (i32, i32) {
    %c0_i32 = arith.constant 0 : i32
    %c0_i32_0 = arith.constant 0 : i32
    %c0_i32_1 = arith.constant 0 : i32
    return %c0_i32, %c0_i32_0 : i32, i32
  }
  func.func @transform_5(%arg0: i32) -> (i32, i32) {
    %c0_i32 = arith.constant 0 : i32
    %c0_i32_0 = arith.constant 0 : i32
    %c0_i32_1 = arith.constant 0 : i32
    return %c0_i32, %c0_i32_0 : i32, i32
  }
  func.func @transform_6(%arg0: i32) -> (i32, i32) {
    %c0_i32 = arith.constant 0 : i32
    %c0_i32_0 = arith.constant 0 : i32
    %c0_i32_1 = arith.constant 0 : i32
    return %c0_i32, %c0_i32_0 : i32, i32
  }
  func.func @transform_7(%arg0: i32) -> (i32, i32) {
    %c0_i32 = arith.constant 0 : i32
    %c0_i32_0 = arith.constant 0 : i32
    %c0_i32_1 = arith.constant 0 : i32
    return %c0_i32, %c0_i32_0 : i32, i32
  }
  func.func @transform_8(%arg0: i32) -> i32 {
    %c0_i32 = arith.constant 0 : i32
    %c0_i32_0 = arith.constant 0 : i32
    return %c0_i32 : i32
  }
  func.func @transform_9(%arg0: i32) -> (i32, i32, i32) {
    %c0_i32 = arith.constant 0 : i32
    %c0_i32_0 = arith.constant 0 : i32
    %c0_i32_1 = arith.constant 0 : i32
    return %arg0, %c0_i32, %c0_i32_0 : i32, i32, i32
  }
}

</mosaic_0001>

<llo_original>
// kernel: m_block_forward.1
$region0: #{m_block_forward.1}
  #allocation0 [shape = 'u32[]', space=smem, size = 0x4, offset = 0x4, fixed_abs, tag = 'smem constant byte address 0x4 - core index']
  #allocation1 [shape = 'u32[144,128]{1,0:T(1,128)}', space=vmem, size = 0x12000, scoped, tag = 'internal scratch']
  #allocation2 [shape = 'f32[72,256]{1,0:T(8,128)}', space=vmem, size = 0x12000, scoped, tag = 'scratch operand']
  %s0 = inlined_call_operand.vmem [shape: f32[2,4,256], index: 0, kind: input, shape index: {}]
  %s1 = inlined_call_operand.vmem [shape: f32[9,256], index: 1, kind: input, shape index: {}]
  %s2 = inlined_call_operand.vmem [shape: f32[2,36], index: 2, kind: input, shape index: {}]
  %s3 = inlined_call_operand.vmem [shape: f32[2,1], index: 3, kind: input, shape index: {}]
  %s4 = inlined_call_operand.vmem [shape: f32[2,54], index: 4, kind: input, shape index: {}]
  %s5 = inlined_call_operand.vmem [shape: f32[2,1], index: 5, kind: input, shape index: {}]
  %s6 = inlined_call_operand.vmem [shape: f32[4,72], index: 6, kind: input, shape index: {}]
  %s7 = inlined_call_operand.vmem [shape: f32[4,1], index: 7, kind: input, shape index: {}]
  %s8 = inlined_call_operand.vmem [shape: f32[3], index: 8, kind: input, shape index: {}]
  %s9 = inlined_call_operand.vmem [shape: f32[2,4,256], index: 9, kind: output, shape index: {}]
  %s10 = sld [smem:[#allocation0]]
  $region73: #{m_block_forward.1} parent=0
    _
  %s12 = ssub.s32 1, %s10
  %s13 = scalar_select 0, %s12, %s10
  $region1: #{m_block_forward.1} parent=0
    #allocation3 [shape = 'u8[512]{0}', space=smem, size = 0x200, scoped, tag = 'input window, operand 8, single buffered']
    #allocation4 [shape = 's32[2]{0}', space=sflag, size = 0x8, scoped, tag = 'scoped memory for m_block_forward.1']
    %14 = vsyncpa [#allocation4], 0
    loop: start=0, step=1, limit=4
    $region2: #{m_block_forward.1} parent=1 // loop_pre_header
      _
    $region3: #{m_block_forward.1} parent=1 // loop_header
      %s16 = sphi 0, %s20
      %p17 = scmp.ge.s32.totalorder %s16, 4
      %s26 = sphi 0, %s28
      %s29 = sphi 0, %s26
      %s30 = sphi 0, %s29
      %s46 = sphi 0, %s30
      %s50 = sphi 0, %s50
      %s52 = sphi 0, %s50
      %s53 = sphi 0, %s52
      %s67 = sphi 0, %s53
      %s71 = sphi 0, %s71
      %s73 = sphi 0, %s71
      %s74 = sphi 0, %s73
      %s88 = sphi 0, %s74
      %s92 = sphi 0, %s92
      %s94 = sphi 0, %s92
      %s95 = sphi 0, %s94
      %s109 = sphi 0, %s95
      %s113 = sphi 0, %s113
      %s115 = sphi 0, %s113
      %s116 = sphi 0, %s115
      %s130 = sphi 0, %s116
      %s134 = sphi 0, %s134
      %s136 = sphi 0, %s134
      %s137 = sphi 0, %s136
      %s151 = sphi 0, %s137
      %s155 = sphi 0, %s155
      %s157 = sphi 0, %s155
      %s158 = sphi 0, %s157
      %s172 = sphi 0, %s158
      %s176 = sphi 0, %s176
      %s178 = sphi 0, %s176
      %s179 = sphi 0, %s178
      %s193 = sphi 0, %s179
      %s197 = sphi 0, %s197
      %s199 = sphi 0, %s197
      %s200 = sphi 0, %s199
      %s214 = sphi 0, %s200
      %s220 = sphi 0, %s222
      %s223 = sphi 0, %s220
      %s224 = sphi 0, %s223
      %s240 = sphi 0, %s224
    $region4: #{m_block_forward.1} parent=1 // loop_header_branch
      %19 = sbr.rel (%p17) target = $region8
    $region5: #{m_block_forward.1} parent=1 // loop_body
      %s21 = ssub.s32 %s16, 1
      %s22 = ssub.s32 %s16, 2
      %s23 = sadd.s32 %s16, 1
      %s24 = ssub.s32 %s16, %s23
      %p25 = scmp.eq.s32.totalorder %s24, 0
      %s27 = sadd.s32 %s26, 1
      %s28 = scalar_select %p25, %s26, %s27
      %p31 = pneg %p25
      %p32 = scmp.eq.s32.totalorder %s16, 1
      %p33 = por %p31, %p32
      %p34 = scmp.ne.s32.totalorder %s26, %s29
      %p35 = scmp.eq.s32.totalorder %s16, 0
      %p36 = por %p34, %p35
      %p37 = scmp.ne.s32.totalorder %s26, %s29
      %p38 = scmp.eq.s32.totalorder %s21, 1
      %p39 = por %p37, %p38
      %p40 = scmp.ne.s32.totalorder %s29, %s30
      %p41 = scmp.eq.s32.totalorder %s21, 0
      %p42 = por %p40, %p41
      %p43 = scmp.ne.s32.totalorder %s29, %s30
      %p44 = scmp.eq.s32.totalorder %s22, 1
      %p45 = por %p43, %p44
      %p47 = scmp.ne.s32.totalorder %s30, %s46
      %p48 = scmp.eq.s32.totalorder %s22, 0
      %p49 = por %p47, %p48
      %s51 = sadd.s32 %s50, 1
      %p54 = scmp.eq.s32.totalorder %s16, 1
      %p55 = scmp.ne.s32.totalorder %s50, %s52
      %p56 = scmp.eq.s32.totalorder %s16, 0
      %p57 = por %p55, %p56
      %p58 = scmp.ne.s32.totalorder %s50, %s52
      %p59 = scmp.eq.s32.totalorder %s21, 1
      %p60 = por %p58, %p59
      %p61 = scmp.ne.s32.totalorder %s52, %s53
      %p62 = scmp.eq.s32.totalorder %s21, 0
      %p63 = por %p61, %p62
      %p64 = scmp.ne.s32.totalorder %s52, %s53
      %p65 = scmp.eq.s32.totalorder %s22, 1
      %p66 = por %p64, %p65
      %p68 = scmp.ne.s32.totalorder %s53, %s67
      %p69 = scmp.eq.s32.totalorder %s22, 0
      %p70 = por %p68, %p69
      %s72 = sadd.s32 %s71, 1
      %p75 = scmp.eq.s32.totalorder %s16, 1
      %p76 = scmp.ne.s32.totalorder %s71, %s73
      %p77 = scmp.eq.s32.totalorder %s16, 0
      %p78 = por %p76, %p77
      %p79 = scmp.ne.s32.totalorder %s71, %s73
      %p80 = scmp.eq.s32.totalorder %s21, 1
      %p81 = por %p79, %p80
      %p82 = scmp.ne.s32.totalorder %s73, %s74
      %p83 = scmp.eq.s32.totalorder %s21, 0
      %p84 = por %p82, %p83
      %p85 = scmp.ne.s32.totalorder %s73, %s74
      %p86 = scmp.eq.s32.totalorder %s22, 1
      %p87 = por %p85, %p86
      %p89 = scmp.ne.s32.totalorder %s74, %s88
      %p90 = scmp.eq.s32.totalorder %s22, 0
      %p91 = por %p89, %p90
      %s93 = sadd.s32 %s92, 1
      %p96 = scmp.eq.s32.totalorder %s16, 1
      %p97 = scmp.ne.s32.totalorder %s92, %s94
      %p98 = scmp.eq.s32.totalorder %s16, 0
      %p99 = por %p97, %p98
      %p100 = scmp.ne.s32.totalorder %s92, %s94
      %p101 = scmp.eq.s32.totalorder %s21, 1
      %p102 = por %p100, %p101
      %p103 = scmp.ne.s32.totalorder %s94, %s95
      %p104 = scmp.eq.s32.totalorder %s21, 0
      %p105 = por %p103, %p104
      %p106 = scmp.ne.s32.totalorder %s94, %s95
      %p107 = scmp.eq.s32.totalorder %s22, 1
      %p108 = por %p106, %p107
      %p110 = scmp.ne.s32.totalorder %s95, %s109
      %p111 = scmp.eq.s32.totalorder %s22, 0
      %p112 = por %p110, %p111
      %s114 = sadd.s32 %s113, 1
      %p117 = scmp.eq.s32.totalorder %s16, 1
      %p118 = scmp.ne.s32.totalorder %s113, %s115
      %p119 = scmp.eq.s32.totalorder %s16, 0
      %p120 = por %p118, %p119
      %p121 = scmp.ne.s32.totalorder %s113, %s115
      %p122 = scmp.eq.s32.totalorder %s21, 1
      %p123 = por %p121, %p122
      %p124 = scmp.ne.s32.totalorder %s115, %s116
      %p125 = scmp.eq.s32.totalorder %s21, 0
      %p126 = por %p124, %p125
      %p127 = scmp.ne.s32.totalorder %s115, %s116
      %p128 = scmp.eq.s32.totalorder %s22, 1
      %p129 = por %p127, %p128
      %p131 = scmp.ne.s32.totalorder %s116, %s130
      %p132 = scmp.eq.s32.totalorder %s22, 0
      %p133 = por %p131, %p132
      %s135 = sadd.s32 %s134, 1
      %p138 = scmp.eq.s32.totalorder %s16, 1
      %p139 = scmp.ne.s32.totalorder %s134, %s136
      %p140 = scmp.eq.s32.totalorder %s16, 0
      %p141 = por %p139, %p140
      %p142 = scmp.ne.s32.totalorder %s134, %s136
      %p143 = scmp.eq.s32.totalorder %s21, 1
      %p144 = por %p142, %p143
      %p145 = scmp.ne.s32.totalorder %s136, %s137
      %p146 = scmp.eq.s32.totalorder %s21, 0
      %p147 = por %p145, %p146
      %p148 = scmp.ne.s32.totalorder %s136, %s137
      %p149 = scmp.eq.s32.totalorder %s22, 1
      %p150 = por %p148, %p149
      %p152 = scmp.ne.s32.totalorder %s137, %s151
      %p153 = scmp.eq.s32.totalorder %s22, 0
      %p154 = por %p152, %p153
      %s156 = sadd.s32 %s155, 1
      %p159 = scmp.eq.s32.totalorder %s16, 1
      %p160 = scmp.ne.s32.totalorder %s155, %s157
      %p161 = scmp.eq.s32.totalorder %s16, 0
      %p162 = por %p160, %p161
      %p163 = scmp.ne.s32.totalorder %s155, %s157
      %p164 = scmp.eq.s32.totalorder %s21, 1
      %p165 = por %p163, %p164
      %p166 = scmp.ne.s32.totalorder %s157, %s158
      %p167 = scmp.eq.s32.totalorder %s21, 0
      %p168 = por %p166, %p167
      %p169 = scmp.ne.s32.totalorder %s157, %s158
      %p170 = scmp.eq.s32.totalorder %s22, 1
      %p171 = por %p169, %p170
      %p173 = scmp.ne.s32.totalorder %s158, %s172
      %p174 = scmp.eq.s32.totalorder %s22, 0
      %p175 = por %p173, %p174
      %s177 = sadd.s32 %s176, 1
      %p180 = scmp.eq.s32.totalorder %s16, 1
      %p181 = scmp.ne.s32.totalorder %s176, %s178
      %p182 = scmp.eq.s32.totalorder %s16, 0
      %p183 = por %p181, %p182
      %p184 = scmp.ne.s32.totalorder %s176, %s178
      %p185 = scmp.eq.s32.totalorder %s21, 1
      %p186 = por %p184, %p185
      %p187 = scmp.ne.s32.totalorder %s178, %s179
      %p188 = scmp.eq.s32.totalorder %s21, 0
      %p189 = por %p187, %p188
      %p190 = scmp.ne.s32.totalorder %s178, %s179
      %p191 = scmp.eq.s32.totalorder %s22, 1
      %p192 = por %p190, %p191
      %p194 = scmp.ne.s32.totalorder %s179, %s193
      %p195 = scmp.eq.s32.totalorder %s22, 0
      %p196 = por %p194, %p195
      %s198 = sadd.s32 %s197, 1
      %p201 = scmp.eq.s32.totalorder %s16, 1
      %p202 = scmp.ne.s32.totalorder %s197, %s199
      %p203 = scmp.eq.s32.totalorder %s16, 0
      %p204 = por %p202, %p203
      %p205 = scmp.ne.s32.totalorder %s197, %s199
      %p206 = scmp.eq.s32.totalorder %s21, 1
      %p207 = por %p205, %p206
      %p208 = scmp.ne.s32.totalorder %s199, %s200
      %p209 = scmp.eq.s32.totalorder %s21, 0
      %p210 = por %p208, %p209
      %p211 = scmp.ne.s32.totalorder %s199, %s200
      %p212 = scmp.eq.s32.totalorder %s22, 1
      %p213 = por %p211, %p212
      %p215 = scmp.ne.s32.totalorder %s200, %s214
      %p216 = scmp.eq.s32.totalorder %s22, 0
      %p217 = por %p215, %p216
      %s218 = ssub.s32 %s16, %s23
      %p219 = scmp.eq.s32.totalorder %s218, 0
      %s221 = sadd.s32 %s220, 1
      %s222 = scalar_select %p219, %s220, %s221
      %p225 = pneg %p219
      %p226 = scmp.eq.s32.totalorder %s16, 1
      %p227 = por %p225, %p226
      %p228 = scmp.ne.s32.totalorder %s220, %s223
      %p229 = scmp.eq.s32.totalorder %s16, 0
      %p230 = por %p228, %p229
      %p231 = scmp.ne.s32.totalorder %s220, %s223
      %p232 = scmp.eq.s32.totalorder %s21, 1
      %p233 = por %p231, %p232
      %p234 = scmp.ne.s32.totalorder %s223, %s224
      %p235 = scmp.eq.s32.totalorder %s21, 0
      %p236 = por %p234, %p235
      %p237 = scmp.ne.s32.totalorder %s223, %s224
      %p238 = scmp.eq.s32.totalorder %s22, 1
      %p239 = por %p237, %p238
      %p241 = scmp.ne.s32.totalorder %s224, %s240
      %p242 = scmp.eq.s32.totalorder %s22, 0
      %p243 = por %p241, %p242
      %p244 = scmp.le.s32.totalorder 1, %s16
      %p245 = scmp.lt.s32.totalorder %s16, 3
      %p246 = pnand %p244, %p245
      %p247 = pneg %p246
      // Predicated region
      $region9: #{m_block_forward.1} parent=5 // pred_check
        _
      $region10: #{m_block_forward.1} parent=5 // pred_check_branch
        %249 = sbr.rel (%p246) target = $region12
      $region11: #{m_block_forward.1} parent=5 // pred_region
        %s250 = ssub.s32 %s16, 1
        // Predicated region
        $region13: #{m_block_forward.1} parent=11 // pred_check
          %p251 = pneg %p63
        $region14: #{m_block_forward.1} parent=11 // pred_check_branch
          %253 = sbr.rel (%p251) target = $region16
        $region15: #{m_block_forward.1} parent=11 // pred_region
          _
        $region16: #{m_block_forward.1} parent=11 // pred_fallthru
          _
        // Predicated region
        $region17: #{m_block_forward.1} parent=11 // pred_check
          %p254 = pneg %p84
        $region18: #{m_block_forward.1} parent=11 // pred_check_branch
          %256 = sbr.rel (%p254) target = $region20
        $region19: #{m_block_forward.1} parent=11 // pred_region
          _
        $region20: #{m_block_forward.1} parent=11 // pred_fallthru
          _
        // Predicated region
        $region21: #{m_block_forward.1} parent=11 // pred_check
          %p257 = pneg %p105
        $region22: #{m_block_forward.1} parent=11 // pred_check_branch
          %259 = sbr.rel (%p257) target = $region24
        $region23: #{m_block_forward.1} parent=11 // pred_region
          _
        $region24: #{m_block_forward.1} parent=11 // pred_fallthru
          _
        // Predicated region
        $region25: #{m_block_forward.1} parent=11 // pred_check
          %p260 = pneg %p126
        $region26: #{m_block_forward.1} parent=11 // pred_check_branch
          %262 = sbr.rel (%p260) target = $region28
        $region27: #{m_block_forward.1} parent=11 // pred_region
          _
        $region28: #{m_block_forward.1} parent=11 // pred_fallthru
          _
        // Predicated region
        $region29: #{m_block_forward.1} parent=11 // pred_check
          %p263 = pneg %p147
        $region30: #{m_block_forward.1} parent=11 // pred_check_branch
          %265 = sbr.rel (%p263) target = $region32
        $region31: #{m_block_forward.1} parent=11 // pred_region
          _
        $region32: #{m_block_forward.1} parent=11 // pred_fallthru
          _
        // Predicated region
        $region33: #{m_block_forward.1} parent=11 // pred_check
          %p266 = pneg %p168
        $region34: #{m_block_forward.1} parent=11 // pred_check_branch
          %268 = sbr.rel (%p266) target = $region36
        $region35: #{m_block_forward.1} parent=11 // pred_region
          _
        $region36: #{m_block_forward.1} parent=11 // pred_fallthru
          _
        // Predicated region
        $region37: #{m_block_forward.1} parent=11 // pred_check
          %p269 = pneg %p189
        $region38: #{m_block_forward.1} parent=11 // pred_check_branch
          %271 = sbr.rel (%p269) target = $region40
        $region39: #{m_block_forward.1} parent=11 // pred_region
          _
        $region40: #{m_block_forward.1} parent=11 // pred_fallthru
          _
        // Predicated region
        $region41: #{m_block_forward.1} parent=11 // pred_check
          %p272 = pneg %p210
        $region42: #{m_block_forward.1} parent=11 // pred_check_branch
          %274 = sbr.rel (%p272) target = $region44
        $region43: #{m_block_forward.1} parent=11 // pred_region
          %s276 = ssub.s32 16, 16
          %277 = vsyncadd [#allocation4], %s276
          %s279 = sshll.u32 %s8, 4
          %s280 = int_to_ptr.vmem [resolvable:$true] %s279
          %282 = dma.vmem_to_smem %s280, 16, [#allocation3], [#allocation4]
        $region44: #{m_block_forward.1} parent=11 // pred_fallthru
          _
      $region12: #{m_block_forward.1} parent=5 // pred_fallthru
        _
      %p283 = scmp.lt.s32.totalorder %s16, 2
      // Predicated region
      $region45: #{m_block_forward.1} parent=5 // pred_check
        %p284 = pneg %p283
      $region46: #{m_block_forward.1} parent=5 // pred_check_branch
        %286 = sbr.rel (%p284) target = $region48
      $region47: #{m_block_forward.1} parent=5 // pred_region
        // Predicated region
        $region49: #{m_block_forward.1} parent=47 // pred_check
          %p287 = pneg %p36
        $region50: #{m_block_forward.1} parent=47 // pred_check_branch
          %289 = sbr.rel (%p287) target = $region52
        $region51: #{m_block_forward.1} parent=47 // pred_region
          %p290 = scmp.lt.s32.totalorder %s16, 1
          %s291 = scalar_select %p290, %s16, 1
          %s292 = smul.addr %s291, 2
          %s293 = smul.addr %s292, 4
          %s294 = scalar_lea.vmem %s0, %s293
        $region52: #{m_block_forward.1} parent=47 // pred_fallthru
          _
      $region48: #{m_block_forward.1} parent=5 // pred_fallthru
        _
      %p295 = scmp.le.s32.totalorder 1, %s16
      %p296 = scmp.lt.s32.totalorder %s16, 3
      %p297 = pnand %p295, %p296
      %p298 = pneg %p297
      // Predicated region
      $region53: #{m_block_forward.1} parent=5 // pred_check
        _
      $region54: #{m_block_forward.1} parent=5 // pred_check_branch
        %300 = sbr.rel (%p297) target = $region56
      $region55: #{m_block_forward.1} parent=5 // pred_region
        %s301 = ssub.s32 %s16, 1
        // Predicated region
        $region57: #{m_block_forward.1} parent=55 // pred_check
          %p302 = pneg %p210
        $region58: #{m_block_forward.1} parent=55 // pred_check_branch
          %304 = sbr.rel (%p302) target = $region60
        $region59: #{m_block_forward.1} parent=55 // pred_region
          %305 = dma.done [#allocation4], 16
        $region60: #{m_block_forward.1} parent=55 // pred_fallthru
          _
        %306 = sfence
        %p307 = scmp.lt.s32.totalorder %s21, 1
        %s308 = scalar_select %p307, %s21, 1
        %s309 = smul.addr %s308, 2
        %s310 = smul.addr %s309, 4
        %s311 = scalar_lea.vmem %s0, %s310
        %p312 = pneg %p42
        %p313 = pneg %p39
        %p314 = pneg %p63
        %p315 = pneg %p60
        %p316 = pneg %p84
        %p317 = pneg %p81
        %p318 = pneg %p105
        %p319 = pneg %p102
        %p320 = pneg %p126
        %p321 = pneg %p123
        %p322 = pneg %p147
        %p323 = pneg %p144
        %p324 = pneg %p168
        %p325 = pneg %p165
        %p326 = pneg %p189
        %p327 = pneg %p186
        %p328 = pneg %p210
        %p329 = pneg %p207
        %p330 = pneg %p236
        %p331 = pneg %p233
        %p332 = scmp.lt.s32.totalorder %s21, 1
        %s333 = scalar_select %p332, %s21, 1
        %s334 = smul.addr %s333, 2
        %s335 = smul.addr %s334, 4
        %s336 = scalar_lea.vmem %s9, %s335
        %p337 = scmp.lt.s32.totalorder %s21, 1
        %s338 = scalar_select %p337, %s21, 1
        %s339 = smul.addr %s338, 2
        %s340 = smul.addr %s339, 4
        %s341 = scalar_lea.vmem %s0, %s340
        %p342 = scmp.lt.s32.totalorder %s21, 1
        %s343 = scalar_select %p342, %s21, 1
        %s344 = smul.addr %s343, 2
        %s345 = smul.addr %s344, 4
        %s346 = scalar_lea.vmem %s9, %s345
        %347 = vst [vmem:[#allocation2] sm:$0xff] 0.0
        %348 = vst [vmem:[#allocation2 + $0x8] sm:$0xff] 0.0
        %349 = vst [vmem:[#allocation2 + $0x10] sm:$0xff] 0.0
        %350 = vst [vmem:[#allocation2 + $0x18] sm:$0xff] 0.0
        %351 = vst [vmem:[#allocation2 + $0x20] sm:$0xff] 0.0
        %352 = vst [vmem:[#allocation2 + $0x28] sm:$0xff] 0.0
        %353 = vst [vmem:[#allocation2 + $0x30] sm:$0xff] 0.0
        %354 = vst [vmem:[#allocation2 + $0x38] sm:$0xff] 0.0
        %355 = vst [vmem:[#allocation2 + $0x40] sm:$0xff] 0.0
        %356 = vst [vmem:[#allocation2 + $0x48] sm:$0xff] 0.0
        %357 = vst [vmem:[#allocation2 + $0x50] sm:$0xff] 0.0
        %358 = vst [vmem:[#allocation2 + $0x58] sm:$0xff] 0.0
        %359 = vst [vmem:[#allocation2 + $0x60] sm:$0xff] 0.0
        %360 = vst [vmem:[#allocation2 + $0x68] sm:$0xff] 0.0
        %361 = vst [vmem:[#allocation2 + $0x70] sm:$0xff] 0.0
        %362 = vst [vmem:[#allocation2 + $0x78] sm:$0xff] 0.0
        %363 = vst [vmem:[#allocation2 + $0x80] sm:$0xff] 0.0
        %364 = vst [vmem:[#allocation2 + $0x88] sm:$0xff] 0.0
        %v365 = vld [vmem:[%s341] sm:$0xff]
        %v366 = vld [vmem:[%s1] ss:$8 sm:$0x3]
        %v368 = vlaneseq
        %v369 = vshrl.u32 %v368, 7
        %v370 = vsub.s32 0, %v369
        %v371 = vrot.slane %v366, %v370
        %v372 = vlaneseq
        %v373 = vshrl.u32 %v372, 7
        %v374 = vsub.s32 1, %v373
        %v375 = vrot.slane %v366, %v374
        %v376 = vcombine.low %v371, %v375
        %377 = vrot.lane.b32.xlu0 %v376, 111
        %v378 = vpop.permute.xlu0 %377
        %v379 = vrot.slane %v378, 4
        %vm380 = vcmask 908288
        %v381 = vsel %vm380, %v378, %v379
        %v383 = vmul.f32 %v365, %v381
        %v385 = vcombine.high %v383, %v383
        %386 = vrot.lane.b32.xlu0 %v383, 17
        %v387 = vpop.permute.xlu0 %386
        %388 = vrot.lane.b32.xlu0 %v385, 17
        %v389 = vpop.permute.xlu0 %388
        %vm390 = vcmask 138240
        %v391 = vsel %vm390, %v387, %v389
        %vm394 = vcmask 1043592
        %395 = vst.msk [vmem:[#allocation2] sm:$0xf] %vm394, %v387
        %396 = vst [vmem:[#allocation2 + $0x8] sm:$0xf] %v391
        %s397 = scalar_lea.vmem %s1, 1
        %v398 = vld [vmem:[%s397] ss:$8 sm:$0x3]
        %v400 = vlaneseq
        %v401 = vshrl.u32 %v400, 7
        %v402 = vsub.s32 0, %v401
        %v403 = vrot.slane %v398, %v402
        %v404 = vlaneseq
        %v405 = vshrl.u32 %v404, 7
        %v406 = vsub.s32 1, %v405
        %v407 = vrot.slane %v398, %v406
        %v408 = vcombine.low %v403, %v407
        %409 = vrot.lane.b32.xlu0 %v408, 112
        %v410 = vpop.permute.xlu0 %409
        %v411 = vrot.slane %v410, 4
        %vm412 = vcmask 916480
        %v413 = vsel %vm412, %v410, %v411
        %v415 = vmul.f32 %v365, %v413
        %v417 = vcombine.low %v415, %v415
        %418 = vrot.lane.b32.xlu0 %v417, 16
        %v419 = vpop.permute.xlu0 %418
        %420 = vrot.lane.b32.xlu0 %v415, 16
        %v421 = vpop.permute.xlu0 %420
        %vm422 = vcmask 130048
        %v423 = vsel %vm422, %v419, %v421
        %vm426 = vcmask 1047684
        %427 = vst.msk [vmem:[#allocation2] sm:$0xf0] %vm426, %v419
        %428 = vst [vmem:[#allocation2 + $0x8] sm:$0xf0] %v423
        %s429 = scalar_lea.vmem %s1, 2
        %v430 = vld [vmem:[%s429] ss:$8 sm:$0x3]
        %v432 = vlaneseq
        %v433 = vshrl.u32 %v432, 7
        %v434 = vsub.s32 0, %v433
        %v435 = vrot.slane %v430, %v434
        %v436 = vlaneseq
        %v437 = vshrl.u32 %v436, 7
        %v438 = vsub.s32 1, %v437
        %v439 = vrot.slane %v430, %v438
        %v440 = vcombine.low %v435, %v439
        %441 = vrot.lane.b32.xlu0 %v440, 113
        %v442 = vpop.permute.xlu0 %441
        %v443 = vrot.slane %v442, 4
        %vm444 = vcmask 924672
        %v445 = vsel %vm444, %v442, %v443
        %v447 = vmul.f32 %v365, %v445
        %v449 = vcombine.high %v447, %v447
        %450 = vrot.lane.b32.xlu0 %v447, 15
        %v451 = vpop.permute.xlu0 %450
        %452 = vrot.lane.b32.xlu0 %v449, 15
        %v453 = vpop.permute.xlu0 %452
        %vm454 = vcmask 121856
        %v455 = vsel %vm454, %v451, %v453
        %vm458 = vcmask 1043576
        %459 = vst.msk [vmem:[#allocation2 + $0x10] sm:$0xf] %vm458, %v451
        %460 = vst [vmem:[#allocation2 + $0x18] sm:$0xf] %v455
        %s461 = scalar_lea.vmem %s1, 3
        %v462 = vld [vmem:[%s461] ss:$8 sm:$0x3]
        %v464 = vlaneseq
        %v465 = vshrl.u32 %v464, 7
        %v466 = vsub.s32 0, %v465
        %v467 = vrot.slane %v462, %v466
        %v468 = vlaneseq
        %v469 = vshrl.u32 %v468, 7
        %v470 = vsub.s32 1, %v469
        %v471 = vrot.slane %v462, %v470
        %v472 = vcombine.low %v467, %v471
        %473 = vrot.lane.b32.xlu0 %v472, 127
        %v474 = vpop.permute.xlu0 %473
        %v475 = vrot.slane %v474, 4
        %vm476 = vcmask 1039360
        %v477 = vsel %vm476, %v474, %v475
        %v479 = vmul.f32 %v365, %v477
        %v481 = vcombine.low %v479, %v479
        %482 = vrot.lane.b32.xlu0 %v481, 1
        %v483 = vpop.permute.xlu0 %482
        %484 = vrot.lane.b32.xlu0 %v479, 1
        %v485 = vpop.permute.xlu0 %484
        %vm486 = vcmask 7168
        %v487 = vsel %vm486, %v483, %v485
        %vm490 = vcmask 1047564
        %491 = vst.msk [vmem:[#allocation2 + $0x10] sm:$0xf0] %vm490, %v483
        %492 = vst [vmem:[#allocation2 + $0x18] sm:$0xf0] %v487
        %v494 = vcombine.high %v365, %v365
        %496 = vst [vmem:[#allocation2 + $0x20] sm:$0xf] %v365
        %497 = vst [vmem:[#allocation2 + $0x28] sm:$0xf] %v494
        %s498 = scalar_lea.vmem %s1, 5
        %v499 = vld [vmem:[%s498] ss:$8 sm:$0x3]
        %v501 = vlaneseq
        %v502 = vshrl.u32 %v501, 7
        %v503 = vsub.s32 0, %v502
        %v504 = vrot.slane %v499, %v503
        %v505 = vlaneseq
        %v506 = vshrl.u32 %v505, 7
        %v507 = vsub.s32 1, %v506
        %v508 = vrot.slane %v499, %v507
        %v509 = vcombine.low %v504, %v508
        %510 = vrot.lane.b32.xlu0 %v509, 1
        %v511 = vpop.permute.xlu0 %510
        %v512 = vrot.slane %v511, 4
        %v513 = vsel %vm486, %v512, %v511
        %v515 = vmul.f32 %v365, %v513
        %v517 = vcombine.low %v515, %v515
        %518 = vrot.lane.b32.xlu0 %v517, 127
        %v519 = vpop.permute.xlu0 %518
        %520 = vrot.lane.b32.xlu0 %v515, 127
        %v521 = vpop.permute.xlu0 %520
        %v522 = vsel %vm476, %v519, %v521
        %525 = vst [vmem:[#allocation2 + $0x20] sm:$0xf0] %v522
        %vm526 = vcmask 1039364
        %527 = vst.msk [vmem:[#allocation2 + $0x28] sm:$0xf0] %vm526, %v521
        %s528 = scalar_lea.vmem %s1, 6
        %v529 = vld [vmem:[%s528] ss:$8 sm:$0x3]
        %v531 = vlaneseq
        %v532 = vshrl.u32 %v531, 7
        %v533 = vsub.s32 0, %v532
        %v534 = vrot.slane %v529, %v533
        %v535 = vlaneseq
        %v536 = vshrl.u32 %v535, 7
        %v537 = vsub.s32 1, %v536
        %v538 = vrot.slane %v529, %v537
        %v539 = vcombine.low %v534, %v538
        %540 = vrot.lane.b32.xlu0 %v539, 15
        %v541 = vpop.permute.xlu0 %540
        %v542 = vrot.slane %v541, 4
        %v543 = vsel %vm454, %v542, %v541
        %v545 = vmul.f32 %v365, %v543
        %v547 = vcombine.high %v545, %v545
        %548 = vrot.lane.b32.xlu0 %v545, 113
        %v549 = vpop.permute.xlu0 %548
        %550 = vrot.lane.b32.xlu0 %v547, 113
        %v551 = vpop.permute.xlu0 %550
        %v552 = vsel %vm444, %v549, %v551
        %555 = vst [vmem:[#allocation2 + $0x30] sm:$0xf] %v552
        %vm556 = vcmask 920576
        %557 = vst.msk [vmem:[#allocation2 + $0x38] sm:$0xf] %vm556, %v551
        %s558 = scalar_lea.vmem %s1, 7
        %v559 = vld [vmem:[%s558] ss:$8 sm:$0x3]
        %v561 = vlaneseq
        %v562 = vshrl.u32 %v561, 7
        %v563 = vsub.s32 0, %v562
        %v564 = vrot.slane %v559, %v563
        %v565 = vlaneseq
        %v566 = vshrl.u32 %v565, 7
        %v567 = vsub.s32 1, %v566
        %v568 = vrot.slane %v559, %v567
        %v569 = vcombine.low %v564, %v568
        %570 = vrot.lane.b32.xlu0 %v569, 16
        %v571 = vpop.permute.xlu0 %570
        %v572 = vrot.slane %v571, 4
        %v573 = vsel %vm422, %v572, %v571
        %v575 = vmul.f32 %v365, %v573
        %v577 = vcombine.low %v575, %v575
        %578 = vrot.lane.b32.xlu0 %v577, 112
        %v579 = vpop.permute.xlu0 %578
        %580 = vrot.lane.b32.xlu0 %v575, 112
        %v581 = vpop.permute.xlu0 %580
        %v582 = vsel %vm412, %v579, %v581
        %585 = vst [vmem:[#allocation2 + $0x30] sm:$0xf0] %v582
        %vm586 = vcmask 916484
        %587 = vst.msk [vmem:[#allocation2 + $0x38] sm:$0xf0] %vm586, %v581
        %s588 = scalar_lea.vmem %s1, 16
        %v589 = vld [vmem:[%s588] ss:$8 sm:$0x3]
        %v591 = vlaneseq
        %v592 = vshrl.u32 %v591, 7
        %v593 = vsub.s32 0, %v592
        %v594 = vrot.slane %v589, %v593
        %v595 = vlaneseq
        %v596 = vshrl.u32 %v595, 7
        %v597 = vsub.s32 1, %v596
        %v598 = vrot.slane %v589, %v597
        %v599 = vcombine.low %v594, %v598
        %600 = vrot.lane.b32.xlu0 %v599, 17
        %v601 = vpop.permute.xlu0 %600
        %v602 = vrot.slane %v601, 4
        %v603 = vsel %vm390, %v602, %v601
        %v605 = vmul.f32 %v365, %v603
        %v607 = vcombine.high %v605, %v605
        %608 = vrot.lane.b32.xlu0 %v605, 111
        %v609 = vpop.permute.xlu0 %608
        %610 = vrot.lane.b32.xlu0 %v607, 111
        %v611 = vpop.permute.xlu0 %610
        %v612 = vsel %vm380, %v609, %v611
        %615 = vst [vmem:[#allocation2 + $0x40] sm:$0xf] %v612
        %vm616 = vcmask 904192
        %617 = vst.msk [vmem:[#allocation2 + $0x48] sm:$0xf] %vm616, %v611
        %v618 = vld [vmem:[%s2] sm:$0x3]
        %v619 = vld [vmem:[#allocation2] sm:$0xff]
        %v620 = vld [vmem:[#allocation2 + $0x8] sm:$0xff]
        %v621 = vld [vmem:[#allocation2 + $0x10] sm:$0xff]
        %v622 = vld [vmem:[#allocation2 + $0x18] sm:$0xff]
        %v623 = vld [vmem:[#allocation2 + $0x20] sm:$0xff]
        %v624 = vld [vmem:[#allocation2 + $0x28] sm:$0xff]
        %v625 = vld [vmem:[#allocation2 + $0x30] sm:$0xff]
        %v626 = vld [vmem:[#allocation2 + $0x38] sm:$0xff]
        %v627 = vld [vmem:[#allocation2 + $0x40] sm:$0xf]
        %v628 = vld [vmem:[#allocation2 + $0x48] sm:$0xf]
        %v629 = vld [vmem:[%s3] sm:$0x3]
        %631 = vset.pattern.permute.xlu0 0
        %632 = vperm.xlu0 %631, %v629
        %v633 = vpop.permute.xlu0 %632
        %vm635 = vcmask 293888
        %v637 = vsel %vm635, %v618, 0
        %vm639 = vcmask 1043456
        %v641 = vsel %vm639, %v627, 0
        %v644 = vsel %vm639, %v628, 0
        %646 = vmatprep.subr.mxu0 %v620
        %647 = vmatpush1.msra.mxu0 %v619
        %648 = vmatprep.subr.mxu0 %v622
        %649 = vmatpush1.msra.mxu0 %v621
        %650 = vmatprep.subr.mxu0 %v624
        %651 = vmatpush1.msra.mxu0 %v623
        %652 = vmatprep.subr.mxu0 %v626
        %653 = vmatpush1.msra.mxu0 %v625
        %654 = vmatprep.subr.mxu0 %v644
        %655 = vmatpush1.msra.mxu0 %v641
        %656 = vmatprep.subr.mxu0 0.0
        %657 = vmatpush1.msra.mxu0 0.0
        %658 = vmatprep.subr.mxu0 0.0
        %659 = vmatpush1.msra.mxu0 0.0
        %660 = vmatprep.subr.mxu0 0.0
        %661 = vmatpush1.msra.mxu0 0.0
        %662 = vmatprep.subr.mxu0 0.0
        %663 = vmatpush1.msra.mxu0 0.0
        %664 = vmatprep.subr.mxu0 0.0
        %665 = vmatpush1.msra.mxu0 0.0
        %666 = vmatprep.subr.mxu0 0.0
        %667 = vmatpush1.msra.mxu0 0.0
        %668 = vmatprep.subr.mxu0 0.0
        %669 = vmatpush1.msra.mxu0 0.0
        %670 = vmatprep.subr.mxu0 0.0
        %671 = vmatpush1.msra.mxu0 0.0
        %672 = vmatprep.subr.mxu0 0.0
        %673 = vmatpush1.msra.mxu0 0.0
        %674 = vmatprep.subr.mxu0 0.0
        %675 = vmatpush1.msra.mxu0 0.0
        %676 = vmatprep.subr.mxu0 0.0
        %677 = vmatpush1.msra.mxu0 0.0
        %678 = vmatprep.subr.mxu0 0.0
        %679 = vmatpush1.msra.mxu0 0.0
        %680 = vmatprep.subr.mxu0 0.0
        %681 = vmatpush1.msra.mxu0 0.0
        %682 = vmatprep.subr.mxu0 0.0
        %683 = vmatpush1.msra.mxu0 0.0
        %684 = vmatprep.subr.mxu0 0.0
        %685 = vmatpush1.msra.mxu0 0.0
        %686 = vmatprep.subr.mxu0 0.0
        %687 = vmatpush1.msra.mxu0 0.0
        %688 = vmatprep.subr.mxu0 0.0
        %689 = vmatpush1.msra.mxu0 0.0
        %690 = vmatprep.subr.mxu0 0.0
        %691 = vmatpush1.msra.mxu0 0.0
        %692 = vmatprep.subr.mxu0 0.0
        %693 = vmatpush1.msra.mxu0 0.0
        %694 = vmatprep.subr.mxu0 0.0
        %695 = vmatpush1.msra.mxu0 0.0
        %696 = vmatprep.subr.mxu0 0.0
        %697 = vmatpush1.msra.mxu0 0.0
        %698 = vmatprep.subr.mxu0 0.0
        %699 = vmatpush1.msra.mxu0 0.0
        %700 = vmatprep.subr.mxu0 0.0
        %701 = vmatpush1.msra.mxu0 0.0
        %702 = vmatprep.subr.mxu0 0.0
        %703 = vmatpush1.msra.mxu0 0.0
        %704 = vmatprep.subr.mxu0 0.0
        %705 = vmatpush1.msra.mxu0 0.0
        %706 = vmatprep.subr.mxu0 0.0
        %707 = vmatpush1.msra.mxu0 0.0
        %708 = vmatprep.subr.mxu0 0.0
        %709 = vmatpush1.msra.mxu0 0.0
        %710 = vmatprep.mubr.f32.mxu0 0.0
        %711 = vmatmul.mubr.f32.gmra.mrb[0].mxu0 %v637
        %v712 = vpop.f32.mrb[0].mxu0
        %v713 = vadd.f32 %v633, %v712
        %v714 = vpop.f32.mrb[0].mxu0
        %v715 = vadd.f32 %v633, %v714
        %716 = vdwg.mxu0
        %vm717 = vcmp.gt.f32.partialorder %v713, 0.0
        %vm718 = vcmp.gt.f32.partialorder %v715, 0.0
        %s719 = sld [smem:[#allocation3]]
        %v720 = vstv %s719
        %v721 = vmul.f32 %v720, %v713
        %v722 = vmul.f32 %v720, %v715
        %v723 = vsel %vm717, %v713, %v721
        %v724 = vsel %vm718, %v715, %v722
        %v725 = vld [vmem:[%s1] ss:$8 sm:$0x3]
        %v727 = vlaneseq
        %v728 = vshrl.u32 %v727, 7
        %v729 = vsub.s32 0, %v728
        %v730 = vrot.slane %v725, %v729
        %v731 = vlaneseq
        %v732 = vshrl.u32 %v731, 7
        %v733 = vsub.s32 1, %v732
        %v734 = vrot.slane %v725, %v733
        %735 = vrot.lane.b32.xlu0 %v730, 111
        %v736 = vpop.permute.xlu0 %735
        %737 = vrot.lane.b32.xlu0 %v734, 111
        %v738 = vpop.permute.xlu0 %737
        %v739 = vsel %vm380, %v736, %v738
        %v742 = vmul.f32 %v723, %v739
        %v743 = vmul.f32 %v724, %v738
        %v746 = vrot.slane %v742, 4
        %v747 = vrot.slane %v743, 4
        %748 = vrot.lane.b32.xlu0 %v746, 17
        %v749 = vpop.permute.xlu0 %748
        %750 = vrot.lane.b32.xlu0 %v747, 17
        %v751 = vpop.permute.xlu0 %750
        %v752 = vsel %vm390, %v749, %v751
        %vm755 = vcmask 1045644
        %756 = vst.msk [vmem:[#allocation2 + $0x40] sm:$0x30] %vm755, %v749
        %757 = vst [vmem:[#allocation2 + $0x48] sm:$0x30] %v752
        %v758 = vld [vmem:[%s397] ss:$8 sm:$0x3]
        %v760 = vlaneseq
        %v761 = vshrl.u32 %v760, 7
        %v762 = vsub.s32 0, %v761
        %v763 = vrot.slane %v758, %v762
        %v764 = vlaneseq
        %v765 = vshrl.u32 %v764, 7
        %v766 = vsub.s32 1, %v765
        %v767 = vrot.slane %v758, %v766
        %768 = vrot.lane.b32.xlu0 %v763, 112
        %v769 = vpop.permute.xlu0 %768
        %770 = vrot.lane.b32.xlu0 %v767, 112
        %v771 = vpop.permute.xlu0 %770
        %v772 = vsel %vm412, %v769, %v771
        %v775 = vmul.f32 %v723, %v772
        %v776 = vmul.f32 %v724, %v771
        %v779 = vrot.slane %v775, 2
        %v780 = vrot.slane %v776, 2
        %781 = vrot.lane.b32.xlu0 %v779, 16
        %v782 = vpop.permute.xlu0 %781
        %783 = vrot.lane.b32.xlu0 %v780, 16
        %v784 = vpop.permute.xlu0 %783
        %v785 = vsel %vm422, %v782, %v784
        %vm788 = vcmask 1047686
        %789 = vst.msk [vmem:[#allocation2 + $0x40] sm:$0xc0] %vm788, %v782
        %790 = vst [vmem:[#allocation2 + $0x48] sm:$0xc0] %v785
        %v791 = vld [vmem:[%s429] ss:$8 sm:$0x3]
        %v793 = vlaneseq
        %v794 = vshrl.u32 %v793, 7
        %v795 = vsub.s32 0, %v794
        %v796 = vrot.slane %v791, %v795
        %v797 = vlaneseq
        %v798 = vshrl.u32 %v797, 7
        %v799 = vsub.s32 1, %v798
        %v800 = vrot.slane %v791, %v799
        %801 = vrot.lane.b32.xlu0 %v796, 113
        %v802 = vpop.permute.xlu0 %801
        %803 = vrot.lane.b32.xlu0 %v800, 113
        %v804 = vpop.permute.xlu0 %803
        %v805 = vsel %vm444, %v802, %v804
        %v808 = vmul.f32 %v723, %v805
        %v809 = vmul.f32 %v724, %v804
        %812 = vrot.lane.b32.xlu0 %v808, 15
        %v813 = vpop.permute.xlu0 %812
        %814 = vrot.lane.b32.xlu0 %v809, 15
        %v815 = vpop.permute.xlu0 %814
        %v816 = vsel %vm454, %v813, %v815
        %vm819 = vcmask 1041528
        %820 = vst.msk [vmem:[#allocation2 + $0x50] sm:$0x3] %vm819, %v813
        %821 = vst [vmem:[#allocation2 + $0x58] sm:$0x3] %v816
        %v822 = vld [vmem:[%s461] ss:$8 sm:$0x3]
        %v824 = vlaneseq
        %v825 = vshrl.u32 %v824, 7
        %v826 = vsub.s32 0, %v825
        %v827 = vrot.slane %v822, %v826
        %v828 = vlaneseq
        %v829 = vshrl.u32 %v828, 7
        %v830 = vsub.s32 1, %v829
        %v831 = vrot.slane %v822, %v830
        %832 = vrot.lane.b32.xlu0 %v827, 127
        %v833 = vpop.permute.xlu0 %832
        %834 = vrot.lane.b32.xlu0 %v831, 127
        %v835 = vpop.permute.xlu0 %834
        %v836 = vsel %vm476, %v833, %v835
        %v839 = vmul.f32 %v723, %v836
        %v840 = vmul.f32 %v724, %v835
        %v843 = vrot.slane %v839, 6
        %v844 = vrot.slane %v840, 6
        %845 = vrot.lane.b32.xlu0 %v843, 1
        %v846 = vpop.permute.xlu0 %845
        %847 = vrot.lane.b32.xlu0 %v844, 1
        %v848 = vpop.permute.xlu0 %847
        %v849 = vsel %vm486, %v846, %v848
        %vm852 = vcmask 1043466
        %853 = vst.msk [vmem:[#allocation2 + $0x50] sm:$0xc] %vm852, %v846
        %854 = vst [vmem:[#allocation2 + $0x58] sm:$0xc] %v849
        %v857 = vrot.slane %v723, 4
        %v858 = vrot.slane %v724, 4
        %861 = vst [vmem:[#allocation2 + $0x50] sm:$0x30] %v857
        %862 = vst [vmem:[#allocation2 + $0x58] sm:$0x30] %v858
        %v863 = vld [vmem:[%s498] ss:$8 sm:$0x3]
        %v865 = vlaneseq
        %v866 = vshrl.u32 %v865, 7
        %v867 = vsub.s32 0, %v866
        %v868 = vrot.slane %v863, %v867
        %v869 = vlaneseq
        %v870 = vshrl.u32 %v869, 7
        %v871 = vsub.s32 1, %v870
        %v872 = vrot.slane %v863, %v871
        %873 = vrot.lane.b32.xlu0 %v868, 1
        %v874 = vpop.permute.xlu0 %873
        %875 = vrot.lane.b32.xlu0 %v872, 1
        %v876 = vpop.permute.xlu0 %875
        %v877 = vsel %vm486, %v874, %v876
        %v880 = vmul.f32 %v723, %v874
        %v881 = vmul.f32 %v724, %v877
        %v884 = vrot.slane %v880, 2
        %v885 = vrot.slane %v881, 2
        %886 = vrot.lane.b32.xlu0 %v884, 127
        %v887 = vpop.permute.xlu0 %886
        %888 = vrot.lane.b32.xlu0 %v885, 127
        %v889 = vpop.permute.xlu0 %888
        %v890 = vsel %vm476, %v887, %v889
        %893 = vst [vmem:[#allocation2 + $0x50] sm:$0xc0] %v890
        %vm894 = vcmask 1039366
        %895 = vst.msk [vmem:[#allocation2 + $0x58] sm:$0xc0] %vm894, %v889
        %v896 = vld [vmem:[%s528] ss:$8 sm:$0x3]
        %v898 = vlaneseq
        %v899 = vshrl.u32 %v898, 7
        %v900 = vsub.s32 0, %v899
        %v901 = vrot.slane %v896, %v900
        %v902 = vlaneseq
        %v903 = vshrl.u32 %v902, 7
        %v904 = vsub.s32 1, %v903
        %v905 = vrot.slane %v896, %v904
        %906 = vrot.lane.b32.xlu0 %v901, 15
        %v907 = vpop.permute.xlu0 %906
        %908 = vrot.lane.b32.xlu0 %v905, 15
        %v909 = vpop.permute.xlu0 %908
        %v910 = vsel %vm454, %v907, %v909
        %v913 = vmul.f32 %v723, %v907
        %v914 = vmul.f32 %v724, %v910
        %917 = vrot.lane.b32.xlu0 %v913, 113
        %v918 = vpop.permute.xlu0 %917
        %919 = vrot.lane.b32.xlu0 %v914, 113
        %v920 = vpop.permute.xlu0 %919
        %v921 = vsel %vm444, %v918, %v920
        %924 = vst [vmem:[#allocation2 + $0x60] sm:$0x3] %v921
        %vm925 = vcmask 918528
        %926 = vst.msk [vmem:[#allocation2 + $0x68] sm:$0x3] %vm925, %v920
        %v927 = vld [vmem:[%s558] ss:$8 sm:$0x3]
        %v929 = vlaneseq
        %v930 = vshrl.u32 %v929, 7
        %v931 = vsub.s32 0, %v930
        %v932 = vrot.slane %v927, %v931
        %v933 = vlaneseq
        %v934 = vshrl.u32 %v933, 7
        %v935 = vsub.s32 1, %v934
        %v936 = vrot.slane %v927, %v935
        %937 = vrot.lane.b32.xlu0 %v932, 16
        %v938 = vpop.permute.xlu0 %937
        %939 = vrot.lane.b32.xlu0 %v936, 16
        %v940 = vpop.permute.xlu0 %939
        %v941 = vsel %vm422, %v938, %v940
        %v944 = vmul.f32 %v723, %v938
        %v945 = vmul.f32 %v724, %v941
        %v948 = vrot.slane %v944, 6
        %v949 = vrot.slane %v945, 6
        %950 = vrot.lane.b32.xlu0 %v948, 112
        %v951 = vpop.permute.xlu0 %950
        %952 = vrot.lane.b32.xlu0 %v949, 112
        %v953 = vpop.permute.xlu0 %952
        %v954 = vsel %vm412, %v951, %v953
        %957 = vst [vmem:[#allocation2 + $0x60] sm:$0xc] %v954
        %vm958 = vcmask 912386
        %959 = vst.msk [vmem:[#allocation2 + $0x68] sm:$0xc] %vm958, %v953
        %v960 = vld [vmem:[%s588] ss:$8 sm:$0x3]
        %v962 = vlaneseq
        %v963 = vshrl.u32 %v962, 7
        %v964 = vsub.s32 0, %v963
        %v965 = vrot.slane %v960, %v964
        %v966 = vlaneseq
        %v967 = vshrl.u32 %v966, 7
        %v968 = vsub.s32 1, %v967
        %v969 = vrot.slane %v960, %v968
        %970 = vrot.lane.b32.xlu0 %v965, 17
        %v971 = vpop.permute.xlu0 %970
        %972 = vrot.lane.b32.xlu0 %v969, 17
        %v973 = vpop.permute.xlu0 %972
        %v974 = vsel %vm390, %v971, %v973
        %v977 = vmul.f32 %v723, %v971
        %v978 = vmul.f32 %v724, %v974
        %v981 = vrot.slane %v977, 4
        %v982 = vrot.slane %v978, 4
        %983 = vrot.lane.b32.xlu0 %v981, 111
        %v984 = vpop.permute.xlu0 %983
        %985 = vrot.lane.b32.xlu0 %v982, 111
        %v986 = vpop.permute.xlu0 %985
        %v987 = vsel %vm380, %v984, %v986
        %990 = vst [vmem:[#allocation2 + $0x60] sm:$0x30] %v987
        %vm991 = vcmask 906244
        %992 = vst.msk [vmem:[#allocation2 + $0x68] sm:$0x30] %vm991, %v986
        %v993 = vld [vmem:[%s4] sm:$0x3]
        %v994 = vld [vmem:[#allocation2] sm:$0xff]
        %v995 = vld [vmem:[#allocation2 + $0x8] sm:$0xff]
        %v996 = vld [vmem:[#allocation2 + $0x10] sm:$0xff]
        %v997 = vld [vmem:[#allocation2 + $0x18] sm:$0xff]
        %v998 = vld [vmem:[#allocation2 + $0x20] sm:$0xff]
        %v999 = vld [vmem:[#allocation2 + $0x28] sm:$0xff]
        %v1000 = vld [vmem:[#allocation2 + $0x30] sm:$0xff]
        %v1001 = vld [vmem:[#allocation2 + $0x38] sm:$0xff]
        %v1002 = vld [vmem:[#allocation2 + $0x40] sm:$0xff]
        %v1003 = vld [vmem:[#allocation2 + $0x48] sm:$0xff]
        %v1004 = vld [vmem:[#allocation2 + $0x50] sm:$0xff]
        %v1005 = vld [vmem:[#allocation2 + $0x58] sm:$0xff]
        %v1006 = vld [vmem:[#allocation2 + $0x60] sm:$0x3f]
        %v1007 = vld [vmem:[#allocation2 + $0x68] sm:$0x3f]
        %v1008 = vld [vmem:[%s5] sm:$0x3]
        %1010 = vset.pattern.permute.xlu0 0
        %1011 = vperm.xlu0 %1010, %v1008
        %v1012 = vpop.permute.xlu0 %1011
        %vm1014 = vcmask 441344
        %v1016 = vsel %vm1014, %v993, 0
        %vm1018 = vcmask 1045504
        %v1020 = vsel %vm1018, %v1006, 0
        %v1023 = vsel %vm1018, %v1007, 0
        %1025 = vmatprep.subr.mxu0 %v995
        %1026 = vmatpush1.msra.mxu0 %v994
        %1027 = vmatprep.subr.mxu0 %v997
        %1028 = vmatpush1.msra.mxu0 %v996
        %1029 = vmatprep.subr.mxu0 %v999
        %1030 = vmatpush1.msra.mxu0 %v998
        %1031 = vmatprep.subr.mxu0 %v1001
        %1032 = vmatpush1.msra.mxu0 %v1000
        %1033 = vmatprep.subr.mxu0 %v1003
        %1034 = vmatpush1.msra.mxu0 %v1002
        %1035 = vmatprep.subr.mxu0 %v1005
        %1036 = vmatpush1.msra.mxu0 %v1004
        %1037 = vmatprep.subr.mxu0 %v1023
        %1038 = vmatpush1.msra.mxu0 %v1020
        %1039 = vmatprep.subr.mxu0 0.0
        %1040 = vmatpush1.msra.mxu0 0.0
        %1041 = vmatprep.subr.mxu0 0.0
        %1042 = vmatpush1.msra.mxu0 0.0
        %1043 = vmatprep.subr.mxu0 0.0
        %1044 = vmatpush1.msra.mxu0 0.0
        %1045 = vmatprep.subr.mxu0 0.0
        %1046 = vmatpush1.msra.mxu0 0.0
        %1047 = vmatprep.subr.mxu0 0.0
        %1048 = vmatpush1.msra.mxu0 0.0
        %1049 = vmatprep.subr.mxu0 0.0
        %1050 = vmatpush1.msra.mxu0 0.0
        %1051 = vmatprep.subr.mxu0 0.0
        %1052 = vmatpush1.msra.mxu0 0.0
        %1053 = vmatprep.subr.mxu0 0.0
        %1054 = vmatpush1.msra.mxu0 0.0
        %1055 = vmatprep.subr.mxu0 0.0
        %1056 = vmatpush1.msra.mxu0 0.0
        %1057 = vmatprep.subr.mxu0 0.0
        %1058 = vmatpush1.msra.mxu0 0.0
        %1059 = vmatprep.subr.mxu0 0.0
        %1060 = vmatpush1.msra.mxu0 0.0
        %1061 = vmatprep.subr.mxu0 0.0
        %1062 = vmatpush1.msra.mxu0 0.0
        %1063 = vmatprep.subr.mxu0 0.0
        %1064 = vmatpush1.msra.mxu0 0.0
        %1065 = vmatprep.subr.mxu0 0.0
        %1066 = vmatpush1.msra.mxu0 0.0
        %1067 = vmatprep.subr.mxu0 0.0
        %1068 = vmatpush1.msra.mxu0 0.0
        %1069 = vmatprep.subr.mxu0 0.0
        %1070 = vmatpush1.msra.mxu0 0.0
        %1071 = vmatprep.subr.mxu0 0.0
        %1072 = vmatpush1.msra.mxu0 0.0
        %1073 = vmatprep.subr.mxu0 0.0
        %1074 = vmatpush1.msra.mxu0 0.0
        %1075 = vmatprep.subr.mxu0 0.0
        %1076 = vmatpush1.msra.mxu0 0.0
        %1077 = vmatprep.subr.mxu0 0.0
        %1078 = vmatpush1.msra.mxu0 0.0
        %1079 = vmatprep.subr.mxu0 0.0
        %1080 = vmatpush1.msra.mxu0 0.0
        %1081 = vmatprep.subr.mxu0 0.0
        %1082 = vmatpush1.msra.mxu0 0.0
        %1083 = vmatprep.subr.mxu0 0.0
        %1084 = vmatpush1.msra.mxu0 0.0
        %1085 = vmatprep.subr.mxu0 0.0
        %1086 = vmatpush1.msra.mxu0 0.0
        %1087 = vmatprep.subr.mxu0 0.0
        %1088 = vmatpush1.msra.mxu0 0.0
        %1089 = vmatprep.mubr.f32.mxu0 0.0
        %1090 = vmatmul.mubr.f32.gmra.mrb[0].mxu0 %v1016
        %v1091 = vpop.f32.mrb[0].mxu0
        %v1092 = vadd.f32 %v1012, %v1091
        %v1093 = vpop.f32.mrb[0].mxu0
        %v1094 = vadd.f32 %v1012, %v1093
        %1095 = vdwg.mxu0
        %vm1096 = vcmp.gt.f32.partialorder %v1092, 0.0
        %vm1097 = vcmp.gt.f32.partialorder %v1094, 0.0
        %s1098 = sld [smem:[#allocation3 + $0x1]]
        %v1099 = vstv %s1098
        %v1100 = vmul.f32 %v1099, %v1092
        %v1101 = vmul.f32 %v1099, %v1094
        %v1102 = vsel %vm1096, %v1092, %v1100
        %v1103 = vsel %vm1097, %v1094, %v1101
        %v1104 = vld [vmem:[%s1] ss:$8 sm:$0x3]
        %v1106 = vlaneseq
        %v1107 = vshrl.u32 %v1106, 7
        %v1108 = vsub.s32 0, %v1107
        %v1109 = vrot.slane %v1104, %v1108
        %v1110 = vlaneseq
        %v1111 = vshrl.u32 %v1110, 7
        %v1112 = vsub.s32 1, %v1111
        %v1113 = vrot.slane %v1104, %v1112
        %1114 = vrot.lane.b32.xlu0 %v1109, 111
        %v1115 = vpop.permute.xlu0 %1114
        %1116 = vrot.lane.b32.xlu0 %v1113, 111
        %v1117 = vpop.permute.xlu0 %1116
        %v1118 = vsel %vm380, %v1115, %v1117
        %v1121 = vmul.f32 %v1102, %v1118
        %v1122 = vmul.f32 %v1103, %v1117
        %v1125 = vrot.slane %v1121, 2
        %v1126 = vrot.slane %v1122, 2
        %1127 = vrot.lane.b32.xlu0 %v1125, 17
        %v1128 = vpop.permute.xlu0 %1127
        %1129 = vrot.lane.b32.xlu0 %v1126, 17
        %v1130 = vpop.permute.xlu0 %1129
        %v1131 = vsel %vm390, %v1128, %v1130
        %vm1134 = vcmask 1047694
        %1135 = vst.msk [vmem:[#allocation2 + $0x60] sm:$0xc0] %vm1134, %v1128
        %1136 = vst [vmem:[#allocation2 + $0x68] sm:$0xc0] %v1131
        %v1137 = vld [vmem:[%s397] ss:$8 sm:$0x3]
        %v1139 = vlaneseq
        %v1140 = vshrl.u32 %v1139, 7
        %v1141 = vsub.s32 0, %v1140
        %v1142 = vrot.slane %v1137, %v1141
        %v1143 = vlaneseq
        %v1144 = vshrl.u32 %v1143, 7
        %v1145 = vsub.s32 1, %v1144
        %v1146 = vrot.slane %v1137, %v1145
        %1147 = vrot.lane.b32.xlu0 %v1142, 112
        %v1148 = vpop.permute.xlu0 %1147
        %1149 = vrot.lane.b32.xlu0 %v1146, 112
        %v1150 = vpop.permute.xlu0 %1149
        %v1151 = vsel %vm412, %v1148, %v1150
        %v1154 = vmul.f32 %v1102, %v1151
        %v1155 = vmul.f32 %v1103, %v1150
        %1158 = vrot.lane.b32.xlu0 %v1154, 16
        %v1159 = vpop.permute.xlu0 %1158
        %1160 = vrot.lane.b32.xlu0 %v1155, 16
        %v1161 = vpop.permute.xlu0 %1160
        %v1162 = vsel %vm422, %v1159, %v1161
        %vm1165 = vcmask 1041536
        %1166 = vst.msk [vmem:[#allocation2 + $0x70] sm:$0x3] %vm1165, %v1159
        %1167 = vst [vmem:[#allocation2 + $0x78] sm:$0x3] %v1162
        %v1168 = vld [vmem:[%s429] ss:$8 sm:$0x3]
        %v1170 = vlaneseq
        %v1171 = vshrl.u32 %v1170, 7
        %v1172 = vsub.s32 0, %v1171
        %v1173 = vrot.slane %v1168, %v1172
        %v1174 = vlaneseq
        %v1175 = vshrl.u32 %v1174, 7
        %v1176 = vsub.s32 1, %v1175
        %v1177 = vrot.slane %v1168, %v1176
        %1178 = vrot.lane.b32.xlu0 %v1173, 113
        %v1179 = vpop.permute.xlu0 %1178
        %1180 = vrot.lane.b32.xlu0 %v1177, 113
        %v1181 = vpop.permute.xlu0 %1180
        %v1182 = vsel %vm444, %v1179, %v1181
        %v1185 = vmul.f32 %v1102, %v1182
        %v1186 = vmul.f32 %v1103, %v1181
        %v1189 = vrot.slane %v1185, 6
        %v1190 = vrot.slane %v1186, 6
        %1191 = vrot.lane.b32.xlu0 %v1189, 15
        %v1192 = vpop.permute.xlu0 %1191
        %1193 = vrot.lane.b32.xlu0 %v1190, 15
        %v1194 = vpop.permute.xlu0 %1193
        %v1195 = vsel %vm454, %v1192, %v1194
        %vm1198 = vcmask 1043578
        %1199 = vst.msk [vmem:[#allocation2 + $0x70] sm:$0xc] %vm1198, %v1192
        %1200 = vst [vmem:[#allocation2 + $0x78] sm:$0xc] %v1195
        %v1201 = vld [vmem:[%s461] ss:$8 sm:$0x3]
        %v1203 = vlaneseq
        %v1204 = vshrl.u32 %v1203, 7
        %v1205 = vsub.s32 0, %v1204
        %v1206 = vrot.slane %v1201, %v1205
        %v1207 = vlaneseq
        %v1208 = vshrl.u32 %v1207, 7
        %v1209 = vsub.s32 1, %v1208
        %v1210 = vrot.slane %v1201, %v1209
        %1211 = vrot.lane.b32.xlu0 %v1206, 127
        %v1212 = vpop.permute.xlu0 %1211
        %1213 = vrot.lane.b32.xlu0 %v1210, 127
        %v1214 = vpop.permute.xlu0 %1213
        %v1215 = vsel %vm476, %v1212, %v1214
        %v1218 = vmul.f32 %v1102, %v1215
        %v1219 = vmul.f32 %v1103, %v1214
        %v1222 = vrot.slane %v1218, 4
        %v1223 = vrot.slane %v1219, 4
        %1224 = vrot.lane.b32.xlu0 %v1222, 1
        %v1225 = vpop.permute.xlu0 %1224
        %1226 = vrot.lane.b32.xlu0 %v1223, 1
        %v1227 = vpop.permute.xlu0 %1226
        %v1228 = vsel %vm486, %v1225, %v1227
        %vm1231 = vcmask 1045516
        %1232 = vst.msk [vmem:[#allocation2 + $0x70] sm:$0x30] %vm1231, %v1225
        %1233 = vst [vmem:[#allocation2 + $0x78] sm:$0x30] %v1228
        %v1236 = vrot.slane %v1102, 2
        %v1237 = vrot.slane %v1103, 2
        %1240 = vst [vmem:[#allocation2 + $0x70] sm:$0xc0] %v1236
        %1241 = vst [vmem:[#allocation2 + $0x78] sm:$0xc0] %v1237
        %v1242 = vld [vmem:[%s498] ss:$8 sm:$0x3]
        %v1244 = vlaneseq
        %v1245 = vshrl.u32 %v1244, 7
        %v1246 = vsub.s32 0, %v1245
        %v1247 = vrot.slane %v1242, %v1246
        %v1248 = vlaneseq
        %v1249 = vshrl.u32 %v1248, 7
        %v1250 = vsub.s32 1, %v1249
        %v1251 = vrot.slane %v1242, %v1250
        %1252 = vrot.lane.b32.xlu0 %v1247, 1
        %v1253 = vpop.permute.xlu0 %1252
        %1254 = vrot.lane.b32.xlu0 %v1251, 1
        %v1255 = vpop.permute.xlu0 %1254
        %v1256 = vsel %vm486, %v1253, %v1255
        %v1259 = vmul.f32 %v1102, %v1253
        %v1260 = vmul.f32 %v1103, %v1256
        %1263 = vrot.lane.b32.xlu0 %v1259, 127
        %v1264 = vpop.permute.xlu0 %1263
        %1265 = vrot.lane.b32.xlu0 %v1260, 127
        %v1266 = vpop.permute.xlu0 %1265
        %v1267 = vsel %vm476, %v1264, %v1266
        %1270 = vst [vmem:[#allocation2 + $0x80] sm:$0x3] %v1267
        %vm1271 = vcmask 1033216
        %1272 = vst.msk [vmem:[#allocation2 + $0x88] sm:$0x3] %vm1271, %v1266
        %v1273 = vld [vmem:[%s528] ss:$8 sm:$0x3]
        %v1275 = vlaneseq
        %v1276 = vshrl.u32 %v1275, 7
        %v1277 = vsub.s32 0, %v1276
        %v1278 = vrot.slane %v1273, %v1277
        %v1279 = vlaneseq
        %v1280 = vshrl.u32 %v1279, 7
        %v1281 = vsub.s32 1, %v1280
        %v1282 = vrot.slane %v1273, %v1281
        %1283 = vrot.lane.b32.xlu0 %v1278, 15
        %v1284 = vpop.permute.xlu0 %1283
        %1285 = vrot.lane.b32.xlu0 %v1282, 15
        %v1286 = vpop.permute.xlu0 %1285
        %v1287 = vsel %vm454, %v1284, %v1286
        %v1290 = vmul.f32 %v1102, %v1284
        %v1291 = vmul.f32 %v1103, %v1287
        %v1294 = vrot.slane %v1290, 6
        %v1295 = vrot.slane %v1291, 6
        %1296 = vrot.lane.b32.xlu0 %v1294, 113
        %v1297 = vpop.permute.xlu0 %1296
        %1298 = vrot.lane.b32.xlu0 %v1295, 113
        %v1299 = vpop.permute.xlu0 %1298
        %v1300 = vsel %vm444, %v1297, %v1299
        %1303 = vst [vmem:[#allocation2 + $0x80] sm:$0xc] %v1300
        %vm1304 = vcmask 920578
        %1305 = vst.msk [vmem:[#allocation2 + $0x88] sm:$0xc] %vm1304, %v1299
        %v1306 = vld [vmem:[%s558] ss:$8 sm:$0x3]
        %v1308 = vlaneseq
        %v1309 = vshrl.u32 %v1308, 7
        %v1310 = vsub.s32 0, %v1309
        %v1311 = vrot.slane %v1306, %v1310
        %v1312 = vlaneseq
        %v1313 = vshrl.u32 %v1312, 7
        %v1314 = vsub.s32 1, %v1313
        %v1315 = vrot.slane %v1306, %v1314
        %1316 = vrot.lane.b32.xlu0 %v1311, 16
        %v1317 = vpop.permute.xlu0 %1316
        %1318 = vrot.lane.b32.xlu0 %v1315, 16
        %v1319 = vpop.permute.xlu0 %1318
        %v1320 = vsel %vm422, %v1317, %v1319
        %v1323 = vmul.f32 %v1102, %v1317
        %v1324 = vmul.f32 %v1103, %v1320
        %v1327 = vrot.slane %v1323, 4
        %v1328 = vrot.slane %v1324, 4
        %1329 = vrot.lane.b32.xlu0 %v1327, 112
        %v1330 = vpop.permute.xlu0 %1329
        %1331 = vrot.lane.b32.xlu0 %v1328, 112
        %v1332 = vpop.permute.xlu0 %1331
        %v1333 = vsel %vm412, %v1330, %v1332
        %1336 = vst [vmem:[#allocation2 + $0x80] sm:$0x30] %v1333
        %vm1337 = vcmask 914436
        %1338 = vst.msk [vmem:[#allocation2 + $0x88] sm:$0x30] %vm1337, %v1332
        %v1339 = vld [vmem:[%s588] ss:$8 sm:$0x3]
        %v1341 = vlaneseq
        %v1342 = vshrl.u32 %v1341, 7
        %v1343 = vsub.s32 0, %v1342
        %v1344 = vrot.slane %v1339, %v1343
        %v1345 = vlaneseq
        %v1346 = vshrl.u32 %v1345, 7
        %v1347 = vsub.s32 1, %v1346
        %v1348 = vrot.slane %v1339, %v1347
        %1349 = vrot.lane.b32.xlu0 %v1344, 17
        %v1350 = vpop.permute.xlu0 %1349
        %1351 = vrot.lane.b32.xlu0 %v1348, 17
        %v1352 = vpop.permute.xlu0 %1351
        %v1353 = vsel %vm390, %v1350, %v1352
        %v1356 = vmul.f32 %v1102, %v1350
        %v1357 = vmul.f32 %v1103, %v1353
        %v1360 = vrot.slane %v1356, 2
        %v1361 = vrot.slane %v1357, 2
        %1362 = vrot.lane.b32.xlu0 %v1360, 111
        %v1363 = vpop.permute.xlu0 %1362
        %1364 = vrot.lane.b32.xlu0 %v1361, 111
        %v1365 = vpop.permute.xlu0 %1364
        %v1366 = vsel %vm380, %v1363, %v1365
        %1369 = vst [vmem:[#allocation2 + $0x80] sm:$0xc0] %v1366
        %vm1370 = vcmask 908294
        %1371 = vst.msk [vmem:[#allocation2 + $0x88] sm:$0xc0] %vm1370, %v1365
        %v1372 = vld [vmem:[%s6] sm:$0xf]
        %v1373 = vld [vmem:[#allocation2] sm:$0xff]
        %v1374 = vld [vmem:[#allocation2 + $0x8] sm:$0xff]
        %v1375 = vld [vmem:[#allocation2 + $0x10] sm:$0xff]
        %v1376 = vld [vmem:[#allocation2 + $0x18] sm:$0xff]
        %v1377 = vld [vmem:[#allocation2 + $0x20] sm:$0xff]
        %v1378 = vld [vmem:[#allocation2 + $0x28] sm:$0xff]
        %v1379 = vld [vmem:[#allocation2 + $0x30] sm:$0xff]
        %v1380 = vld [vmem:[#allocation2 + $0x38] sm:$0xff]
        %v1381 = vld [vmem:[#allocation2 + $0x40] sm:$0xff]
        %v1382 = vld [vmem:[#allocation2 + $0x48] sm:$0xff]
        %v1383 = vld [vmem:[#allocation2 + $0x50] sm:$0xff]
        %v1384 = vld [vmem:[#allocation2 + $0x58] sm:$0xff]
        %v1385 = vld [vmem:[#allocation2 + $0x60] sm:$0xff]
        %v1386 = vld [vmem:[#allocation2 + $0x68] sm:$0xff]
        %v1387 = vld [vmem:[#allocation2 + $0x70] sm:$0xff]
        %v1388 = vld [vmem:[#allocation2 + $0x78] sm:$0xff]
        %v1389 = vld [vmem:[#allocation2 + $0x80] sm:$0xff]
        %v1390 = vld [vmem:[#allocation2 + $0x88] sm:$0xff]
        %v1391 = vld [vmem:[%s7] sm:$0xf]
        %1393 = vset.pattern.permute.xlu0 0
        %1394 = vperm.xlu0 %1393, %v1391
        %v1395 = vpop.permute.xlu0 %1394
        %vm1397 = vcmask 588800
        %v1399 = vsel %vm1397, %v1372, 0
        %1401 = vmatprep.subr.mxu0 %v1374
        %1402 = vmatpush1.msra.mxu0 %v1373
        %1403 = vmatprep.subr.mxu0 %v1376
        %1404 = vmatpush1.msra.mxu0 %v1375
        %1405 = vmatprep.subr.mxu0 %v1378
        %1406 = vmatpush1.msra.mxu0 %v1377
        %1407 = vmatprep.subr.mxu0 %v1380
        %1408 = vmatpush1.msra.mxu0 %v1379
        %1409 = vmatprep.subr.mxu0 %v1382
        %1410 = vmatpush1.msra.mxu0 %v1381
        %1411 = vmatprep.subr.mxu0 %v1384
        %1412 = vmatpush1.msra.mxu0 %v1383
        %1413 = vmatprep.subr.mxu0 %v1386
        %1414 = vmatpush1.msra.mxu0 %v1385
        %1415 = vmatprep.subr.mxu0 %v1388
        %1416 = vmatpush1.msra.mxu0 %v1387
        %1417 = vmatprep.subr.mxu0 %v1390
        %1418 = vmatpush1.msra.mxu0 %v1389
        %1419 = vmatprep.subr.mxu0 0.0
        %1420 = vmatpush1.msra.mxu0 0.0
        %1421 = vmatprep.subr.mxu0 0.0
        %1422 = vmatpush1.msra.mxu0 0.0
        %1423 = vmatprep.subr.mxu0 0.0
        %1424 = vmatpush1.msra.mxu0 0.0
        %1425 = vmatprep.subr.mxu0 0.0
        %1426 = vmatpush1.msra.mxu0 0.0
        %1427 = vmatprep.subr.mxu0 0.0
        %1428 = vmatpush1.msra.mxu0 0.0
        %1429 = vmatprep.subr.mxu0 0.0
        %1430 = vmatpush1.msra.mxu0 0.0
        %1431 = vmatprep.subr.mxu0 0.0
        %1432 = vmatpush1.msra.mxu0 0.0
        %1433 = vmatprep.subr.mxu0 0.0
        %1434 = vmatpush1.msra.mxu0 0.0
        %1435 = vmatprep.subr.mxu0 0.0
        %1436 = vmatpush1.msra.mxu0 0.0
        %1437 = vmatprep.subr.mxu0 0.0
        %1438 = vmatpush1.msra.mxu0 0.0
        %1439 = vmatprep.subr.mxu0 0.0
        %1440 = vmatpush1.msra.mxu0 0.0
        %1441 = vmatprep.subr.mxu0 0.0
        %1442 = vmatpush1.msra.mxu0 0.0
        %1443 = vmatprep.subr.mxu0 0.0
        %1444 = vmatpush1.msra.mxu0 0.0
        %1445 = vmatprep.subr.mxu0 0.0
        %1446 = vmatpush1.msra.mxu0 0.0
        %1447 = vmatprep.subr.mxu0 0.0
        %1448 = vmatpush1.msra.mxu0 0.0
        %1449 = vmatprep.subr.mxu0 0.0
        %1450 = vmatpush1.msra.mxu0 0.0
        %1451 = vmatprep.subr.mxu0 0.0
        %1452 = vmatpush1.msra.mxu0 0.0
        %1453 = vmatprep.subr.mxu0 0.0
        %1454 = vmatpush1.msra.mxu0 0.0
        %1455 = vmatprep.subr.mxu0 0.0
        %1456 = vmatpush1.msra.mxu0 0.0
        %1457 = vmatprep.subr.mxu0 0.0
        %1458 = vmatpush1.msra.mxu0 0.0
        %1459 = vmatprep.subr.mxu0 0.0
        %1460 = vmatpush1.msra.mxu0 0.0
        %1461 = vmatprep.subr.mxu0 0.0
        %1462 = vmatpush1.msra.mxu0 0.0
        %1463 = vmatprep.subr.mxu0 0.0
        %1464 = vmatpush1.msra.mxu0 0.0
        %1465 = vmatprep.mubr.f32.mxu0 0.0
        %1466 = vmatmul.mubr.f32.gmra.mrb[0].mxu0 %v1399
        %v1467 = vpop.f32.mrb[0].mxu0
        %v1468 = vadd.f32 %v1395, %v1467
        %v1469 = vpop.f32.mrb[0].mxu0
        %v1470 = vadd.f32 %v1395, %v1469
        %1471 = vdwg.mxu0
        %vm1472 = vcmp.gt.f32.partialorder %v1468, 0.0
        %vm1473 = vcmp.gt.f32.partialorder %v1470, 0.0
        %s1474 = sld [smem:[#allocation3 + $0x2]]
        %v1475 = vstv %s1474
        %v1476 = vmul.f32 %v1475, %v1468
        %v1477 = vmul.f32 %v1475, %v1470
        %v1478 = vsel %vm1472, %v1468, %v1476
        %v1479 = vsel %vm1473, %v1470, %v1477
        %v1480 = vadd.f32 %v1478, %v365
        %v1481 = vadd.f32 %v1479, %v494
        %v1484 = vcombine.low %v1480, %v1481
        %1486 = vst [vmem:[%s346] sm:$0xff] %v1484
        %p1487 = scmp.lt.s32.totalorder %s21, 1
        %s1488 = scalar_select %p1487, %s21, 1
        %s1489 = smul.addr %s1488, 2
        %s1490 = smul.addr %s1489, 4
        %s1491 = scalar_lea.vmem %s9, %s1490
        // Predicated region
        $region61: #{m_block_forward.1} parent=55 // pred_check
          %p1492 = pneg %p233
        $region62: #{m_block_forward.1} parent=55 // pred_check_branch
          %1494 = sbr.rel (%p1492) target = $region64
        $region63: #{m_block_forward.1} parent=55 // pred_region
          _
        $region64: #{m_block_forward.1} parent=55 // pred_fallthru
          _
      $region56: #{m_block_forward.1} parent=5 // pred_fallthru
        _
      %p1495 = scmp.le.s32.totalorder 2, %s16
      // Predicated region
      $region65: #{m_block_forward.1} parent=5 // pred_check
        %p1496 = pneg %p1495
      $region66: #{m_block_forward.1} parent=5 // pred_check_branch
        %1498 = sbr.rel (%p1496) target = $region68
      $region67: #{m_block_forward.1} parent=5 // pred_region
        %s1499 = ssub.s32 %s16, 2
        // Predicated region
        $region69: #{m_block_forward.1} parent=67 // pred_check
          %p1500 = pneg %p239
        $region70: #{m_block_forward.1} parent=67 // pred_check_branch
          %1502 = sbr.rel (%p1500) target = $region72
        $region71: #{m_block_forward.1} parent=67 // pred_region
          %p1503 = scmp.lt.s32.totalorder %s22, 1
          %s1504 = scalar_select %p1503, %s22, 1
          %s1505 = smul.addr %s1504, 2
          %s1506 = smul.addr %s1505, 4
          %s1507 = scalar_lea.vmem %s9, %s1506
        $region72: #{m_block_forward.1} parent=67 // pred_fallthru
          _
      $region68: #{m_block_forward.1} parent=5 // pred_fallthru
        _
    $region6: #{m_block_forward.1} parent=1 // loop_footer
      %s20 = sadd.s32 1, %s16
    $region7: #{m_block_forward.1} parent=1 // loop_footer_branch
      %15 = sbr.rel target = $region3
    $region8: #{m_block_forward.1} parent=1 // loop_exit
      _
    %1508 = vsyncpa [#allocation4], 1
    %s1509 = scalar_lea.sflag [#allocation4], 1
    %1510 = vsyncpa %s1509, 1

</llo_original>
